<compile_context>
chip_gen: v5e
topology: v5e:2x2
jax: 0.10.0
libtpu: 0.0.40
codegen_flags: <defaults>
</compile_context>

<pallas_src>
import jax
import jax.numpy as jnp
from jax.experimental import pallas as pl
from jax.experimental.pallas import tpu as pltpu


EMB_DIMS = 1024
CIN = 3              # real input channels (xyz)
CIN_PAD = 8          # pad 3 -> 8 for sublane-aligned input blocks
TM_MAX = 512         # points per grid step (multiple of 128)
LAYER_DIMS = [(3, 64), (64, 64), (64, 64), (64, 128), (128, EMB_DIMS)]


def _pointnet_kernel(x_ref,
                     w1_ref, b1_ref, w2_ref, b2_ref, w3_ref, b3_ref,
                     w4_ref, b4_ref, w5_ref, b5_ref,
                     out_ref):
    """Channel-major fused PointNet MLP.

    x_ref  : (CIN_PAD, TM) f32   -- rows 0..2 are xyz, rest zero padding
    w1     : (64, CIN_PAD) f32   -- layer 1 stays f32
    w2..w5 : (Cout, Cin) bf16    -- MXU operands
    b1..b5 : (Cout, 1) f32
    out_ref: (EMB_DIMS, TM) f32  -- already in the PyTorch (emb, points) layout
    """
    x = x_ref[...]
    w1 = w1_ref[...]
    # Layer 1: only 3 real input channels -> 3 f32 FMAs on the VPU. Raw xyz
    # coordinates never touch bf16, matching torch Conv1d f32 numerics.
    h = (w1[:, 0:1] * x[0:1, :]
         + w1[:, 1:2] * x[1:2, :]
         + w1[:, 2:3] * x[2:3, :]
         + b1_ref[...])
    h = jnp.maximum(h, 0.0).astype(jnp.bfloat16)            # (64, TM) bf16

    def layer(h_bf16, w_ref, b_ref):
        acc = jnp.dot(w_ref[...], h_bf16,
                      preferred_element_type=jnp.float32)   # MXU, f32 accum
        return jnp.maximum(acc + b_ref[...], 0.0)           # f32 bias + ReLU

    h = layer(h, w2_ref, b2_ref).astype(jnp.bfloat16)        # (64, TM)
    h = layer(h, w3_ref, b3_ref).astype(jnp.bfloat16)        # (64, TM)
    h = layer(h, w4_ref, b4_ref).astype(jnp.bfloat16)        # (128, TM)
    h = layer(h, w5_ref, b5_ref)                             # (1024, TM) f32
    out_ref[...] = h.astype(out_ref.dtype)                   # lane-dense store


def _resident_spec(shape):
    # Whole (small) weight/bias array resident in VMEM; same block every step.
    nd = len(shape)
    return pl.BlockSpec(shape, lambda b, i, _nd=nd: (0,) * _nd)


def _choose_tm(n, batch):
    tm = min(TM_MAX, pl.cdiv(n, 128) * 128)
    # v7x has 2 TensorCores sharding the "parallel" grid axes; keep >= 2 steps
    # when possible (v5e/v6e are single-TC so this is harmless there).
    if batch == 1 and pl.cdiv(n, tm) < 2 and tm > 128:
        tm = max(128, pl.cdiv(pl.cdiv(n, 2), 128) * 128)
    return tm


@jax.jit
def pointnet_forward(x_bnc, params):
    """x_bnc: (B, N, 3) float32 ('bnc').  Returns (B, EMB_DIMS, N) float32,
    matching PointNet(emb_dims=1024, input_shape='bnc', use_bn=False,
    global_feat=True).forward(x)."""
    (w1, b1), (w2, b2), (w3, b3), (w4, b4), (w5, b5) = params
    B, N, C = x_bnc.shape
    assert C == CIN, "shape of x must be [Batch x NumInPoints x 3] for 'bnc'"

    tm = _choose_tm(N, B)
    n_tiles = pl.cdiv(N, tm)
    n_pad = n_tiles * tm

    # Channel-major input, zero-padded: (B, N, 3) -> (B, 8, n_pad). Tiny array;
    # padded point columns are masked out of the final-tile writeback by Pallas.
    x_cm = jnp.transpose(x_bnc.astype(jnp.float32), (0, 2, 1))
    x_cm = jnp.pad(x_cm, ((0, 0), (0, CIN_PAD - C), (0, n_pad - N)))

    # Weights channel-major (C_out, C_in): layer 1 f32 (zero-padded cols),
    # layers 2-5 as bf16 MXU operands. Biases (C_out, 1) f32.
    w1p = jnp.pad(w1.astype(jnp.float32), ((0, 0), (0, CIN_PAD - C)))
    ws = [w1p] + [w.astype(jnp.bfloat16) for w in (w2, w3, w4, w5)]
    bs = [b.reshape(-1, 1).astype(jnp.float32) for b in (b1, b2, b3, b4, b5)]

    flops = 2 * B * n_pad * sum(ci * co for ci, co in LAYER_DIMS)
    bytes_accessed = (x_cm.size * 4 + B * EMB_DIMS * N * 4
                      + sum(int(w.size) * w.dtype.itemsize for w in ws)
                      + sum(int(b.size) * 4 for b in bs))

    weight_args, weight_specs = [], []
    for w, b in zip(ws, bs):
        weight_args += [w, b]
        weight_specs += [_resident_spec(w.shape), _resident_spec(b.shape)]

    out = pl.pallas_call(
        _pointnet_kernel,
        out_shape=jax.ShapeDtypeStruct((B, EMB_DIMS, N), jnp.float32),
        grid_spec=pltpu.PrefetchScalarGridSpec(
            num_scalar_prefetch=0,
            grid=(B, n_tiles),
            in_specs=[pl.BlockSpec((None, CIN_PAD, tm), lambda b, i: (b, 0, i))]
                     + weight_specs,
            out_specs=pl.BlockSpec((None, EMB_DIMS, tm), lambda b, i: (b, 0, i)),
        ),
        compiler_params=pltpu.CompilerParams(
            dimension_semantics=("parallel", "parallel"),
            vmem_limit_bytes=32 * 1024 * 1024),
        cost_estimate=pl.CostEstimate(flops=int(flops), transcendentals=0,
                                      bytes_accessed=int(bytes_accessed)),
    )(x_cm, *weight_args)
    return out                                  # (B, EMB_DIMS, N), f32


def init_params(key):
    """Deterministic init mirroring torch.nn.Conv1d default U(-1/sqrt(fan_in), +),
    weights stored channel-major as (C_out, C_in)."""
    params = []
    for i, (cin, cout) in enumerate(LAYER_DIMS):
        kw, kb = jax.random.split(jax.random.fold_in(key, i))
        bound = 1.0 / float(cin) ** 0.5
        w = jax.random.uniform(kw, (cout, cin), jnp.float32, -bound, bound)
        b = jax.random.uniform(kb, (cout,), jnp.float32, -bound, bound)
        params.append((w, b))
    return tuple(params)


def pointnet_reference(x_bnc, params):
    """Pure-f32 JAX reference of the PyTorch module (Conv1d k=1 + ReLU stack)."""
    h = jnp.transpose(x_bnc.astype(jnp.float32), (0, 2, 1))   # (B, 3, N)
    for w, b in params:
        h = jnp.maximum(jnp.einsum('oc,bcn->bon', w, h) + b[None, :, None], 0.0)
    return h                                                  # (B, EMB, N)


if __name__ == "__main__":
    key = jax.random.PRNGKey(0)
    k_x, k_p = jax.random.split(key)

    B, N = 2, 16
    x = jax.random.normal(k_x, (B, N, 3), jnp.float32)        # 'bnc' input
    params = init_params(k_p)

    out = jax.block_until_ready(pointnet_forward(x, params))
    assert out.shape == (B, EMB_DIMS, N), out.shape

    ref = pointnet_reference(x, params)
    # Layers 2-5 use bf16 MXU operands (f32 accumulation); layer 1 (raw xyz)
    # stays f32 -> compare against the true f32 reference with a bf16-level
    # tolerance.
    assert jnp.allclose(out, ref, atol=2e-2, rtol=2e-2), "mismatch vs reference"

    print("KERNEL_OK")
</pallas_src>

<mosaic_0001>
module attributes {stable_mosaic.version = 11 : i64} {
  func.func @_pointnet_kernel(%arg0: i32, %arg1: i32, %arg2: memref<1x8x128xf32, #tpu.memory_space<vmem>>, %arg3: memref<64x8xf32, #tpu.memory_space<vmem>>, %arg4: memref<64x1xf32, #tpu.memory_space<vmem>>, %arg5: memref<64x64xbf16, #tpu.memory_space<vmem>>, %arg6: memref<64x1xf32, #tpu.memory_space<vmem>>, %arg7: memref<64x64xbf16, #tpu.memory_space<vmem>>, %arg8: memref<64x1xf32, #tpu.memory_space<vmem>>, %arg9: memref<128x64xbf16, #tpu.memory_space<vmem>>, %arg10: memref<128x1xf32, #tpu.memory_space<vmem>>, %arg11: memref<1024x128xbf16, #tpu.memory_space<vmem>>, %arg12: memref<1024x1xf32, #tpu.memory_space<vmem>>, %arg13: memref<1x1024x128xf32, #tpu.memory_space<vmem>>) attributes {dimension_semantics = [#tpu.dimension_semantics<parallel>, #tpu.dimension_semantics<parallel>], iteration_bounds = array<i64: 2, 1>, scalar_prefetch = 0 : i64, scratch_operands = 0 : i64, tpu.core_type = #tpu.core_type<tc>, window_params = [{transform_indices = @transform_0, window_bounds = array<i64: 1, 8, 128>}, {pipeline_mode = #tpu.pipeline_mode<synchronous>, transform_indices = @transform_1, window_bounds = array<i64: 64, 8>}, {pipeline_mode = #tpu.pipeline_mode<synchronous>, transform_indices = @transform_2, window_bounds = array<i64: 64, 1>}, {pipeline_mode = #tpu.pipeline_mode<synchronous>, transform_indices = @transform_3, window_bounds = array<i64: 64, 64>}, {pipeline_mode = #tpu.pipeline_mode<synchronous>, transform_indices = @transform_4, window_bounds = array<i64: 64, 1>}, {pipeline_mode = #tpu.pipeline_mode<synchronous>, transform_indices = @transform_5, window_bounds = array<i64: 64, 64>}, {pipeline_mode = #tpu.pipeline_mode<synchronous>, transform_indices = @transform_6, window_bounds = array<i64: 64, 1>}, {pipeline_mode = #tpu.pipeline_mode<synchronous>, transform_indices = @transform_7, window_bounds = array<i64: 128, 64>}, {pipeline_mode = #tpu.pipeline_mode<synchronous>, transform_indices = @transform_8, window_bounds = array<i64: 128, 1>}, {pipeline_mode = #tpu.pipeline_mode<synchronous>, transform_indices = @transform_9, window_bounds = array<i64: 1024, 128>}, {pipeline_mode = #tpu.pipeline_mode<synchronous>, transform_indices = @transform_10, window_bounds = array<i64: 1024, 1>}, {transform_indices = @transform_11, window_bounds = array<i64: 1, 1024, 128>}]} {
    %c0 = arith.constant 0 : index
    %c0_0 = arith.constant 0 : index
    %c0_1 = arith.constant 0 : index
    %0 = vector.load %arg2[%c0, %c0_0, %c0_1] : memref<1x8x128xf32, #tpu.memory_space<vmem>>, vector<1x8x128xf32>
    %1 = vector.shape_cast %0 : vector<1x8x128xf32> to vector<8x128xf32>
    %c0_2 = arith.constant 0 : index
    %c0_3 = arith.constant 0 : index
    %2 = vector.load %arg3[%c0_2, %c0_3] : memref<64x8xf32, #tpu.memory_space<vmem>>, vector<64x8xf32>
    %3 = vector.extract_strided_slice %2 {offsets = [0, 0], sizes = [64, 1], strides = [1, 1]} : vector<64x8xf32> to vector<64x1xf32>
    %4 = vector.extract_strided_slice %1 {offsets = [0, 0], sizes = [1, 128], strides = [1, 1]} : vector<8x128xf32> to vector<1x128xf32>
    %5 = vector.broadcast %3 : vector<64x1xf32> to vector<64x128xf32>
    %6 = vector.broadcast %4 : vector<1x128xf32> to vector<64x128xf32>
    %7 = arith.mulf %5, %6 : vector<64x128xf32>
    %8 = vector.extract_strided_slice %2 {offsets = [0, 1], sizes = [64, 1], strides = [1, 1]} : vector<64x8xf32> to vector<64x1xf32>
    %9 = vector.extract_strided_slice %1 {offsets = [1, 0], sizes = [1, 128], strides = [1, 1]} : vector<8x128xf32> to vector<1x128xf32>
    %10 = vector.broadcast %8 : vector<64x1xf32> to vector<64x128xf32>
    %11 = vector.broadcast %9 : vector<1x128xf32> to vector<64x128xf32>
    %12 = arith.mulf %10, %11 : vector<64x128xf32>
    %13 = arith.addf %7, %12 : vector<64x128xf32>
    %14 = vector.extract_strided_slice %2 {offsets = [0, 2], sizes = [64, 1], strides = [1, 1]} : vector<64x8xf32> to vector<64x1xf32>
    %15 = vector.extract_strided_slice %1 {offsets = [2, 0], sizes = [1, 128], strides = [1, 1]} : vector<8x128xf32> to vector<1x128xf32>
    %16 = vector.broadcast %14 : vector<64x1xf32> to vector<64x128xf32>
    %17 = vector.broadcast %15 : vector<1x128xf32> to vector<64x128xf32>
    %18 = arith.mulf %16, %17 : vector<64x128xf32>
    %19 = arith.addf %13, %18 : vector<64x128xf32>
    %c0_4 = arith.constant 0 : index
    %c0_5 = arith.constant 0 : index
    %20 = vector.load %arg4[%c0_4, %c0_5] : memref<64x1xf32, #tpu.memory_space<vmem>>, vector<64x1xf32>
    %21 = vector.broadcast %20 : vector<64x1xf32> to vector<64x128xf32>
    %22 = arith.addf %19, %21 : vector<64x128xf32>
    %cst = arith.constant 0.000000e+00 : f32
    %23 = vector.broadcast %cst : f32 to vector<64x128xf32>
    %24 = arith.maximumf %22, %23 : vector<64x128xf32>
    %25 = arith.truncf %24 : vector<64x128xf32> to vector<64x128xbf16>
    %c0_6 = arith.constant 0 : index
    %c0_7 = arith.constant 0 : index
    %26 = vector.load %arg5[%c0_6, %c0_7] : memref<64x64xbf16, #tpu.memory_space<vmem>>, vector<64x64xbf16>
    %cst_8 = arith.constant dense<0.000000e+00> : vector<64x128xf32>
    %27 = tpu.matmul %26, %25, %cst_8 {dimension_numbers = #tpu.dot_dimension_numbers<[1], [0], [0], [1], [0, 0, 1, 1], [], []>} : vector<64x64xbf16>, vector<64x128xbf16>, vector<64x128xf32> -> vector<64x128xf32>
    %c0_9 = arith.constant 0 : index
    %c0_10 = arith.constant 0 : index
    %28 = vector.load %arg6[%c0_9, %c0_10] : memref<64x1xf32, #tpu.memory_space<vmem>>, vector<64x1xf32>
    %29 = vector.broadcast %28 : vector<64x1xf32> to vector<64x128xf32>
    %30 = arith.addf %27, %29 : vector<64x128xf32>
    %cst_11 = arith.constant 0.000000e+00 : f32
    %31 = vector.broadcast %cst_11 : f32 to vector<64x128xf32>
    %32 = arith.maximumf %30, %31 : vector<64x128xf32>
    %33 = arith.truncf %32 : vector<64x128xf32> to vector<64x128xbf16>
    %c0_12 = arith.constant 0 : index
    %c0_13 = arith.constant 0 : index
    %34 = vector.load %arg7[%c0_12, %c0_13] : memref<64x64xbf16, #tpu.memory_space<vmem>>, vector<64x64xbf16>
    %cst_14 = arith.constant dense<0.000000e+00> : vector<64x128xf32>
    %35 = tpu.matmul %34, %33, %cst_14 {dimension_numbers = #tpu.dot_dimension_numbers<[1], [0], [0], [1], [0, 0, 1, 1], [], []>} : vector<64x64xbf16>, vector<64x128xbf16>, vector<64x128xf32> -> vector<64x128xf32>
    %c0_15 = arith.constant 0 : index
    %c0_16 = arith.constant 0 : index
    %36 = vector.load %arg8[%c0_15, %c0_16] : memref<64x1xf32, #tpu.memory_space<vmem>>, vector<64x1xf32>
    %37 = vector.broadcast %36 : vector<64x1xf32> to vector<64x128xf32>
    %38 = arith.addf %35, %37 : vector<64x128xf32>
    %cst_17 = arith.constant 0.000000e+00 : f32
    %39 = vector.broadcast %cst_17 : f32 to vector<64x128xf32>
    %40 = arith.maximumf %38, %39 : vector<64x128xf32>
    %41 = arith.truncf %40 : vector<64x128xf32> to vector<64x128xbf16>
    %c0_18 = arith.constant 0 : index
    %c0_19 = arith.constant 0 : index
    %42 = vector.load %arg9[%c0_18, %c0_19] : memref<128x64xbf16, #tpu.memory_space<vmem>>, vector<128x64xbf16>
    %cst_20 = arith.constant dense<0.000000e+00> : vector<128x128xf32>
    %43 = tpu.matmul %42, %41, %cst_20 {dimension_numbers = #tpu.dot_dimension_numbers<[1], [0], [0], [1], [0, 0, 1, 1], [], []>} : vector<128x64xbf16>, vector<64x128xbf16>, vector<128x128xf32> -> vector<128x128xf32>
    %c0_21 = arith.constant 0 : index
    %c0_22 = arith.constant 0 : index
    %44 = vector.load %arg10[%c0_21, %c0_22] : memref<128x1xf32, #tpu.memory_space<vmem>>, vector<128x1xf32>
    %45 = vector.broadcast %44 : vector<128x1xf32> to vector<128x128xf32>
    %46 = arith.addf %43, %45 : vector<128x128xf32>
    %cst_23 = arith.constant 0.000000e+00 : f32
    %47 = vector.broadcast %cst_23 : f32 to vector<128x128xf32>
    %48 = arith.maximumf %46, %47 : vector<128x128xf32>
    %49 = arith.truncf %48 : vector<128x128xf32> to vector<128x128xbf16>
    %c0_24 = arith.constant 0 : index
    %c0_25 = arith.constant 0 : index
    %50 = vector.load %arg11[%c0_24, %c0_25] : memref<1024x128xbf16, #tpu.memory_space<vmem>>, vector<1024x128xbf16>
    %cst_26 = arith.constant dense<0.000000e+00> : vector<1024x128xf32>
    %51 = tpu.matmul %50, %49, %cst_26 {dimension_numbers = #tpu.dot_dimension_numbers<[1], [0], [0], [1], [0, 0, 1, 1], [], []>} : vector<1024x128xbf16>, vector<128x128xbf16>, vector<1024x128xf32> -> vector<1024x128xf32>
    %c0_27 = arith.constant 0 : index
    %c0_28 = arith.constant 0 : index
    %52 = vector.load %arg12[%c0_27, %c0_28] : memref<1024x1xf32, #tpu.memory_space<vmem>>, vector<1024x1xf32>
    %53 = vector.broadcast %52 : vector<1024x1xf32> to vector<1024x128xf32>
    %54 = arith.addf %51, %53 : vector<1024x128xf32>
    %cst_29 = arith.constant 0.000000e+00 : f32
    %55 = vector.broadcast %cst_29 : f32 to vector<1024x128xf32>
    %56 = arith.maximumf %54, %55 : vector<1024x128xf32>
    %c0_30 = arith.constant 0 : index
    %c0_31 = arith.constant 0 : index
    %c0_32 = arith.constant 0 : index
    %57 = vector.load %arg13[%c0_30, %c0_31, %c0_32] : memref<1x1024x128xf32, #tpu.memory_space<vmem>>, vector<1x1024x128xf32>
    %58 = vector.shape_cast %57 : vector<1x1024x128xf32> to vector<1024x128xf32>
    %59 = vector.shape_cast %56 : vector<1024x128xf32> to vector<1x1024x128xf32>
    tpu.vector_store %arg13[%c0_30, %c0_31, %c0_32], %59 {strides = array<i32>} : memref<1x1024x128xf32, #tpu.memory_space<vmem>>, vector<1x1024x128xf32>,
    return
  }
  func.func @transform_0(%arg0: i32, %arg1: i32) -> (i32, i32, i32) {
    %c0_i32 = arith.constant 0 : i32
    %c0_i32_0 = arith.constant 0 : i32
    return %arg0, %c0_i32, %arg1 : i32, i32, i32
  }
  func.func @transform_1(%arg0: i32, %arg1: i32) -> (i32, i32) {
    %c0_i32 = arith.constant 0 : i32
    %c0_i32_0 = arith.constant 0 : i32
    %c0_i32_1 = arith.constant 0 : i32
    return %c0_i32, %c0_i32_0 : i32, i32
  }
  func.func @transform_2(%arg0: i32, %arg1: i32) -> (i32, i32) {
    %c0_i32 = arith.constant 0 : i32
    %c0_i32_0 = arith.constant 0 : i32
    %c0_i32_1 = arith.constant 0 : i32
    return %c0_i32, %c0_i32_0 : i32, i32
  }
  func.func @transform_3(%arg0: i32, %arg1: i32) -> (i32, i32) {
    %c0_i32 = arith.constant 0 : i32
    %c0_i32_0 = arith.constant 0 : i32
    %c0_i32_1 = arith.constant 0 : i32
    return %c0_i32, %c0_i32_0 : i32, i32
  }
  func.func @transform_4(%arg0: i32, %arg1: i32) -> (i32, i32) {
    %c0_i32 = arith.constant 0 : i32
    %c0_i32_0 = arith.constant 0 : i32
    %c0_i32_1 = arith.constant 0 : i32
    return %c0_i32, %c0_i32_0 : i32, i32
  }
  func.func @transform_5(%arg0: i32, %arg1: i32) -> (i32, i32) {
    %c0_i32 = arith.constant 0 : i32
    %c0_i32_0 = arith.constant 0 : i32
    %c0_i32_1 = arith.constant 0 : i32
    return %c0_i32, %c0_i32_0 : i32, i32
  }
  func.func @transform_6(%arg0: i32, %arg1: i32) -> (i32, i32) {
    %c0_i32 = arith.constant 0 : i32
    %c0_i32_0 = arith.constant 0 : i32
    %c0_i32_1 = arith.constant 0 : i32
    return %c0_i32, %c0_i32_0 : i32, i32
  }
  func.func @transform_7(%arg0: i32, %arg1: i32) -> (i32, i32) {
    %c0_i32 = arith.constant 0 : i32
    %c0_i32_0 = arith.constant 0 : i32
    %c0_i32_1 = arith.constant 0 : i32
    return %c0_i32, %c0_i32_0 : i32, i32
  }
  func.func @transform_8(%arg0: i32, %arg1: i32) -> (i32, i32) {
    %c0_i32 = arith.constant 0 : i32
    %c0_i32_0 = arith.constant 0 : i32
    %c0_i32_1 = arith.constant 0 : i32
    return %c0_i32, %c0_i32_0 : i32, i32
  }
  func.func @transform_9(%arg0: i32, %arg1: i32) -> (i32, i32) {
    %c0_i32 = arith.constant 0 : i32
    %c0_i32_0 = arith.constant 0 : i32
    %c0_i32_1 = arith.constant 0 : i32
    return %c0_i32, %c0_i32_0 : i32, i32
  }
  func.func @transform_10(%arg0: i32, %arg1: i32) -> (i32, i32) {
    %c0_i32 = arith.constant 0 : i32
    %c0_i32_0 = arith.constant 0 : i32
    %c0_i32_1 = arith.constant 0 : i32
    return %c0_i32, %c0_i32_0 : i32, i32
  }
  func.func @transform_11(%arg0: i32, %arg1: i32) -> (i32, i32, i32) {
    %c0_i32 = arith.constant 0 : i32
    %c0_i32_0 = arith.constant 0 : i32
    return %arg0, %c0_i32, %arg1 : i32, i32, i32
  }
}

</mosaic_0001>

<llo_original>
// kernel: pointnet_forward.1
$region0: #{pointnet_forward.1}
  #allocation0 [shape = 'u32[]', space=smem, size = 0x4, offset = 0x4, fixed_abs, tag = 'smem constant byte address 0x4 - core index']
  #allocation1 [shape = 'u32[72,128]{1,0:T(1,128)}', space=vmem, size = 0x9000, scoped, tag = 'internal scratch']
  %s0 = inlined_call_operand.vmem [shape: f32[2,8,128], index: 0, kind: input, shape index: {}]
  %s1 = inlined_call_operand.vmem [shape: f32[64,8], index: 1, kind: input, shape index: {}]
  %s2 = inlined_call_operand.vmem [shape: f32[64,1], index: 2, kind: input, shape index: {}]
  %s3 = inlined_call_operand.vmem [shape: bf16[64,64], index: 3, kind: input, shape index: {}]
  %s4 = inlined_call_operand.vmem [shape: f32[64,1], index: 4, kind: input, shape index: {}]
  %s5 = inlined_call_operand.vmem [shape: bf16[64,64], index: 5, kind: input, shape index: {}]
  %s6 = inlined_call_operand.vmem [shape: f32[64,1], index: 6, kind: input, shape index: {}]
  %s7 = inlined_call_operand.vmem [shape: bf16[128,64], index: 7, kind: input, shape index: {}]
  %s8 = inlined_call_operand.vmem [shape: f32[128,1], index: 8, kind: input, shape index: {}]
  %s9 = inlined_call_operand.vmem [shape: bf16[1024,128], index: 9, kind: input, shape index: {}]
  %s10 = inlined_call_operand.vmem [shape: f32[1024,1], index: 10, kind: input, shape index: {}]
  %s11 = inlined_call_operand.vmem [shape: f32[2,1024,16], index: 11, kind: output, shape index: {}]
  %s12 = sld [smem:[#allocation0]]
  $region77: #{pointnet_forward.1} parent=0
    _
  %s14 = ssub.s32 1, %s12
  %s15 = scalar_select 0, %s14, %s12
  loop: start=0, step=1, limit=4
  $region2: #{pointnet_forward.1} parent=0 // loop_pre_header
    _
  $region3: #{pointnet_forward.1} parent=0 // loop_header
    %s17 = sphi 0, %s21
    %p18 = scmp.ge.s32.totalorder %s17, 4
    %s24 = sphi 0, %s36
    %s25 = sphi 0, %s32
    %s26 = sphi 0, %s24
    %s27 = sphi 0, %s25
    %s28 = sphi 0, %s26
    %s29 = sphi 0, %s27
    %s41 = sphi 0, %s43
    %s44 = sphi 0, %s41
    %s45 = sphi 0, %s44
    %s61 = sphi 0, %s45
    %s65 = sphi 0, %s65
    %s67 = sphi 0, %s65
    %s68 = sphi 0, %s67
    %s82 = sphi 0, %s68
    %s86 = sphi 0, %s86
    %s88 = sphi 0, %s86
    %s89 = sphi 0, %s88
    %s103 = sphi 0, %s89
    %s107 = sphi 0, %s107
    %s109 = sphi 0, %s107
    %s110 = sphi 0, %s109
    %s124 = sphi 0, %s110
    %s128 = sphi 0, %s128
    %s130 = sphi 0, %s128
    %s131 = sphi 0, %s130
    %s145 = sphi 0, %s131
    %s149 = sphi 0, %s149
    %s151 = sphi 0, %s149
    %s152 = sphi 0, %s151
    %s166 = sphi 0, %s152
    %s170 = sphi 0, %s170
    %s172 = sphi 0, %s170
    %s173 = sphi 0, %s172
    %s187 = sphi 0, %s173
    %s191 = sphi 0, %s191
    %s193 = sphi 0, %s191
    %s194 = sphi 0, %s193
    %s208 = sphi 0, %s194
    %s212 = sphi 0, %s212
    %s214 = sphi 0, %s212
    %s215 = sphi 0, %s214
    %s229 = sphi 0, %s215
    %s233 = sphi 0, %s233
    %s235 = sphi 0, %s233
    %s236 = sphi 0, %s235
    %s250 = sphi 0, %s236
    %s254 = sphi 0, %s254
    %s256 = sphi 0, %s254
    %s257 = sphi 0, %s256
    %s271 = sphi 0, %s257
    %s279 = sphi 0, %s281
    %s282 = sphi 0, %s279
    %s283 = sphi 0, %s282
    %s299 = sphi 0, %s283
  $region4: #{pointnet_forward.1} parent=0 // loop_header_branch
    %20 = sbr.rel (%p18) target = $region8
  $region5: #{pointnet_forward.1} parent=0 // loop_body
    %s22 = ssub.s32 %s17, 1
    %s23 = ssub.s32 %s17, 2
    %s30 = sadd.s32 1, %s25
    %p31 = scmp.ge.s32.totalorder %s30, 1
    %s32 = scalar_select %p31, 0, %s30
    %s33 = sadd.s32 1, %s24
    %s34 = scalar_select %p31, %s33, %s24
    %p35 = scmp.ge.s32.totalorder %s34, 2
    %s36 = scalar_select %p35, 0, %s34
    %s37 = ssub.s32 %s24, %s36
    %s38 = ssub.s32 %s25, %s32
    %s39 = sor.u32 %s37, %s38
    %p40 = scmp.eq.s32.totalorder %s39, 0
    %s42 = sadd.s32 %s41, 1
    %s43 = scalar_select %p40, %s41, %s42
    %p46 = pneg %p40
    %p47 = scmp.eq.s32.totalorder %s17, 1
    %p48 = por %p46, %p47
    %p49 = scmp.ne.s32.totalorder %s41, %s44
    %p50 = scmp.eq.s32.totalorder %s17, 0
    %p51 = por %p49, %p50
    %p52 = scmp.ne.s32.totalorder %s41, %s44
    %p53 = scmp.eq.s32.totalorder %s22, 1
    %p54 = por %p52, %p53
    %p55 = scmp.ne.s32.totalorder %s44, %s45
    %p56 = scmp.eq.s32.totalorder %s22, 0
    %p57 = por %p55, %p56
    %p58 = scmp.ne.s32.totalorder %s44, %s45
    %p59 = scmp.eq.s32.totalorder %s23, 1
    %p60 = por %p58, %p59
    %p62 = scmp.ne.s32.totalorder %s45, %s61
    %p63 = scmp.eq.s32.totalorder %s23, 0
    %p64 = por %p62, %p63
    %s66 = sadd.s32 %s65, 1
    %p69 = scmp.eq.s32.totalorder %s17, 1
    %p70 = scmp.ne.s32.totalorder %s65, %s67
    %p71 = scmp.eq.s32.totalorder %s17, 0
    %p72 = por %p70, %p71
    %p73 = scmp.ne.s32.totalorder %s65, %s67
    %p74 = scmp.eq.s32.totalorder %s22, 1
    %p75 = por %p73, %p74
    %p76 = scmp.ne.s32.totalorder %s67, %s68
    %p77 = scmp.eq.s32.totalorder %s22, 0
    %p78 = por %p76, %p77
    %p79 = scmp.ne.s32.totalorder %s67, %s68
    %p80 = scmp.eq.s32.totalorder %s23, 1
    %p81 = por %p79, %p80
    %p83 = scmp.ne.s32.totalorder %s68, %s82
    %p84 = scmp.eq.s32.totalorder %s23, 0
    %p85 = por %p83, %p84
    %s87 = sadd.s32 %s86, 1
    %p90 = scmp.eq.s32.totalorder %s17, 1
    %p91 = scmp.ne.s32.totalorder %s86, %s88
    %p92 = scmp.eq.s32.totalorder %s17, 0
    %p93 = por %p91, %p92
    %p94 = scmp.ne.s32.totalorder %s86, %s88
    %p95 = scmp.eq.s32.totalorder %s22, 1
    %p96 = por %p94, %p95
    %p97 = scmp.ne.s32.totalorder %s88, %s89
    %p98 = scmp.eq.s32.totalorder %s22, 0
    %p99 = por %p97, %p98
    %p100 = scmp.ne.s32.totalorder %s88, %s89
    %p101 = scmp.eq.s32.totalorder %s23, 1
    %p102 = por %p100, %p101
    %p104 = scmp.ne.s32.totalorder %s89, %s103
    %p105 = scmp.eq.s32.totalorder %s23, 0
    %p106 = por %p104, %p105
    %s108 = sadd.s32 %s107, 1
    %p111 = scmp.eq.s32.totalorder %s17, 1
    %p112 = scmp.ne.s32.totalorder %s107, %s109
    %p113 = scmp.eq.s32.totalorder %s17, 0
    %p114 = por %p112, %p113
    %p115 = scmp.ne.s32.totalorder %s107, %s109
    %p116 = scmp.eq.s32.totalorder %s22, 1
    %p117 = por %p115, %p116
    %p118 = scmp.ne.s32.totalorder %s109, %s110
    %p119 = scmp.eq.s32.totalorder %s22, 0
    %p120 = por %p118, %p119
    %p121 = scmp.ne.s32.totalorder %s109, %s110
    %p122 = scmp.eq.s32.totalorder %s23, 1
    %p123 = por %p121, %p122
    %p125 = scmp.ne.s32.totalorder %s110, %s124
    %p126 = scmp.eq.s32.totalorder %s23, 0
    %p127 = por %p125, %p126
    %s129 = sadd.s32 %s128, 1
    %p132 = scmp.eq.s32.totalorder %s17, 1
    %p133 = scmp.ne.s32.totalorder %s128, %s130
    %p134 = scmp.eq.s32.totalorder %s17, 0
    %p135 = por %p133, %p134
    %p136 = scmp.ne.s32.totalorder %s128, %s130
    %p137 = scmp.eq.s32.totalorder %s22, 1
    %p138 = por %p136, %p137
    %p139 = scmp.ne.s32.totalorder %s130, %s131
    %p140 = scmp.eq.s32.totalorder %s22, 0
    %p141 = por %p139, %p140
    %p142 = scmp.ne.s32.totalorder %s130, %s131
    %p143 = scmp.eq.s32.totalorder %s23, 1
    %p144 = por %p142, %p143
    %p146 = scmp.ne.s32.totalorder %s131, %s145
    %p147 = scmp.eq.s32.totalorder %s23, 0
    %p148 = por %p146, %p147
    %s150 = sadd.s32 %s149, 1
    %p153 = scmp.eq.s32.totalorder %s17, 1
    %p154 = scmp.ne.s32.totalorder %s149, %s151
    %p155 = scmp.eq.s32.totalorder %s17, 0
    %p156 = por %p154, %p155
    %p157 = scmp.ne.s32.totalorder %s149, %s151
    %p158 = scmp.eq.s32.totalorder %s22, 1
    %p159 = por %p157, %p158
    %p160 = scmp.ne.s32.totalorder %s151, %s152
    %p161 = scmp.eq.s32.totalorder %s22, 0
    %p162 = por %p160, %p161
    %p163 = scmp.ne.s32.totalorder %s151, %s152
    %p164 = scmp.eq.s32.totalorder %s23, 1
    %p165 = por %p163, %p164
    %p167 = scmp.ne.s32.totalorder %s152, %s166
    %p168 = scmp.eq.s32.totalorder %s23, 0
    %p169 = por %p167, %p168
    %s171 = sadd.s32 %s170, 1
    %p174 = scmp.eq.s32.totalorder %s17, 1
    %p175 = scmp.ne.s32.totalorder %s170, %s172
    %p176 = scmp.eq.s32.totalorder %s17, 0
    %p177 = por %p175, %p176
    %p178 = scmp.ne.s32.totalorder %s170, %s172
    %p179 = scmp.eq.s32.totalorder %s22, 1
    %p180 = por %p178, %p179
    %p181 = scmp.ne.s32.totalorder %s172, %s173
    %p182 = scmp.eq.s32.totalorder %s22, 0
    %p183 = por %p181, %p182
    %p184 = scmp.ne.s32.totalorder %s172, %s173
    %p185 = scmp.eq.s32.totalorder %s23, 1
    %p186 = por %p184, %p185
    %p188 = scmp.ne.s32.totalorder %s173, %s187
    %p189 = scmp.eq.s32.totalorder %s23, 0
    %p190 = por %p188, %p189
    %s192 = sadd.s32 %s191, 1
    %p195 = scmp.eq.s32.totalorder %s17, 1
    %p196 = scmp.ne.s32.totalorder %s191, %s193
    %p197 = scmp.eq.s32.totalorder %s17, 0
    %p198 = por %p196, %p197
    %p199 = scmp.ne.s32.totalorder %s191, %s193
    %p200 = scmp.eq.s32.totalorder %s22, 1
    %p201 = por %p199, %p200
    %p202 = scmp.ne.s32.totalorder %s193, %s194
    %p203 = scmp.eq.s32.totalorder %s22, 0
    %p204 = por %p202, %p203
    %p205 = scmp.ne.s32.totalorder %s193, %s194
    %p206 = scmp.eq.s32.totalorder %s23, 1
    %p207 = por %p205, %p206
    %p209 = scmp.ne.s32.totalorder %s194, %s208
    %p210 = scmp.eq.s32.totalorder %s23, 0
    %p211 = por %p209, %p210
    %s213 = sadd.s32 %s212, 1
    %p216 = scmp.eq.s32.totalorder %s17, 1
    %p217 = scmp.ne.s32.totalorder %s212, %s214
    %p218 = scmp.eq.s32.totalorder %s17, 0
    %p219 = por %p217, %p218
    %p220 = scmp.ne.s32.totalorder %s212, %s214
    %p221 = scmp.eq.s32.totalorder %s22, 1
    %p222 = por %p220, %p221
    %p223 = scmp.ne.s32.totalorder %s214, %s215
    %p224 = scmp.eq.s32.totalorder %s22, 0
    %p225 = por %p223, %p224
    %p226 = scmp.ne.s32.totalorder %s214, %s215
    %p227 = scmp.eq.s32.totalorder %s23, 1
    %p228 = por %p226, %p227
    %p230 = scmp.ne.s32.totalorder %s215, %s229
    %p231 = scmp.eq.s32.totalorder %s23, 0
    %p232 = por %p230, %p231
    %s234 = sadd.s32 %s233, 1
    %p237 = scmp.eq.s32.totalorder %s17, 1
    %p238 = scmp.ne.s32.totalorder %s233, %s235
    %p239 = scmp.eq.s32.totalorder %s17, 0
    %p240 = por %p238, %p239
    %p241 = scmp.ne.s32.totalorder %s233, %s235
    %p242 = scmp.eq.s32.totalorder %s22, 1
    %p243 = por %p241, %p242
    %p244 = scmp.ne.s32.totalorder %s235, %s236
    %p245 = scmp.eq.s32.totalorder %s22, 0
    %p246 = por %p244, %p245
    %p247 = scmp.ne.s32.totalorder %s235, %s236
    %p248 = scmp.eq.s32.totalorder %s23, 1
    %p249 = por %p247, %p248
    %p251 = scmp.ne.s32.totalorder %s236, %s250
    %p252 = scmp.eq.s32.totalorder %s23, 0
    %p253 = por %p251, %p252
    %s255 = sadd.s32 %s254, 1
    %p258 = scmp.eq.s32.totalorder %s17, 1
    %p259 = scmp.ne.s32.totalorder %s254, %s256
    %p260 = scmp.eq.s32.totalorder %s17, 0
    %p261 = por %p259, %p260
    %p262 = scmp.ne.s32.totalorder %s254, %s256
    %p263 = scmp.eq.s32.totalorder %s22, 1
    %p264 = por %p262, %p263
    %p265 = scmp.ne.s32.totalorder %s256, %s257
    %p266 = scmp.eq.s32.totalorder %s22, 0
    %p267 = por %p265, %p266
    %p268 = scmp.ne.s32.totalorder %s256, %s257
    %p269 = scmp.eq.s32.totalorder %s23, 1
    %p270 = por %p268, %p269
    %p272 = scmp.ne.s32.totalorder %s257, %s271
    %p273 = scmp.eq.s32.totalorder %s23, 0
    %p274 = por %p272, %p273
    %s275 = ssub.s32 %s24, %s36
    %s276 = ssub.s32 %s25, %s32
    %s277 = sor.u32 %s275, %s276
    %p278 = scmp.eq.s32.totalorder %s277, 0
    %s280 = sadd.s32 %s279, 1
    %s281 = scalar_select %p278, %s279, %s280
    %p284 = pneg %p278
    %p285 = scmp.eq.s32.totalorder %s17, 1
    %p286 = por %p284, %p285
    %p287 = scmp.ne.s32.totalorder %s279, %s282
    %p288 = scmp.eq.s32.totalorder %s17, 0
    %p289 = por %p287, %p288
    %p290 = scmp.ne.s32.totalorder %s279, %s282
    %p291 = scmp.eq.s32.totalorder %s22, 1
    %p292 = por %p290, %p291
    %p293 = scmp.ne.s32.totalorder %s282, %s283
    %p294 = scmp.eq.s32.totalorder %s22, 0
    %p295 = por %p293, %p294
    %p296 = scmp.ne.s32.totalorder %s282, %s283
    %p297 = scmp.eq.s32.totalorder %s23, 1
    %p298 = por %p296, %p297
    %p300 = scmp.ne.s32.totalorder %s283, %s299
    %p301 = scmp.eq.s32.totalorder %s23, 0
    %p302 = por %p300, %p301
    %p303 = scmp.le.s32.totalorder 1, %s17
    %p304 = scmp.lt.s32.totalorder %s17, 3
    %p305 = pnand %p303, %p304
    %p306 = pneg %p305
    // Predicated region
    $region9: #{pointnet_forward.1} parent=5 // pred_check
      _
    $region10: #{pointnet_forward.1} parent=5 // pred_check_branch
      %308 = sbr.rel (%p305) target = $region12
    $region11: #{pointnet_forward.1} parent=5 // pred_region
      %s309 = ssub.s32 %s17, 1
      // Predicated region
      $region13: #{pointnet_forward.1} parent=11 // pred_check
        %p310 = pneg %p78
      $region14: #{pointnet_forward.1} parent=11 // pred_check_branch
        %312 = sbr.rel (%p310) target = $region16
      $region15: #{pointnet_forward.1} parent=11 // pred_region
        _
      $region16: #{pointnet_forward.1} parent=11 // pred_fallthru
        _
      // Predicated region
      $region17: #{pointnet_forward.1} parent=11 // pred_check
        %p313 = pneg %p99
      $region18: #{pointnet_forward.1} parent=11 // pred_check_branch
        %315 = sbr.rel (%p313) target = $region20
      $region19: #{pointnet_forward.1} parent=11 // pred_region
        _
      $region20: #{pointnet_forward.1} parent=11 // pred_fallthru
        _
      // Predicated region
      $region21: #{pointnet_forward.1} parent=11 // pred_check
        %p316 = pneg %p120
      $region22: #{pointnet_forward.1} parent=11 // pred_check_branch
        %318 = sbr.rel (%p316) target = $region24
      $region23: #{pointnet_forward.1} parent=11 // pred_region
        _
      $region24: #{pointnet_forward.1} parent=11 // pred_fallthru
        _
      // Predicated region
      $region25: #{pointnet_forward.1} parent=11 // pred_check
        %p319 = pneg %p141
      $region26: #{pointnet_forward.1} parent=11 // pred_check_branch
        %321 = sbr.rel (%p319) target = $region28
      $region27: #{pointnet_forward.1} parent=11 // pred_region
        _
      $region28: #{pointnet_forward.1} parent=11 // pred_fallthru
        _
      // Predicated region
      $region29: #{pointnet_forward.1} parent=11 // pred_check
        %p322 = pneg %p162
      $region30: #{pointnet_forward.1} parent=11 // pred_check_branch
        %324 = sbr.rel (%p322) target = $region32
      $region31: #{pointnet_forward.1} parent=11 // pred_region
        _
      $region32: #{pointnet_forward.1} parent=11 // pred_fallthru
        _
      // Predicated region
      $region33: #{pointnet_forward.1} parent=11 // pred_check
        %p325 = pneg %p183
      $region34: #{pointnet_forward.1} parent=11 // pred_check_branch
        %327 = sbr.rel (%p325) target = $region36
      $region35: #{pointnet_forward.1} parent=11 // pred_region
        _
      $region36: #{pointnet_forward.1} parent=11 // pred_fallthru
        _
      // Predicated region
      $region37: #{pointnet_forward.1} parent=11 // pred_check
        %p328 = pneg %p204
      $region38: #{pointnet_forward.1} parent=11 // pred_check_branch
        %330 = sbr.rel (%p328) target = $region40
      $region39: #{pointnet_forward.1} parent=11 // pred_region
        _
      $region40: #{pointnet_forward.1} parent=11 // pred_fallthru
        _
      // Predicated region
      $region41: #{pointnet_forward.1} parent=11 // pred_check
        %p331 = pneg %p225
      $region42: #{pointnet_forward.1} parent=11 // pred_check_branch
        %333 = sbr.rel (%p331) target = $region44
      $region43: #{pointnet_forward.1} parent=11 // pred_region
        _
      $region44: #{pointnet_forward.1} parent=11 // pred_fallthru
        _
      // Predicated region
      $region45: #{pointnet_forward.1} parent=11 // pred_check
        %p334 = pneg %p246
      $region46: #{pointnet_forward.1} parent=11 // pred_check_branch
        %336 = sbr.rel (%p334) target = $region48
      $region47: #{pointnet_forward.1} parent=11 // pred_region
        _
      $region48: #{pointnet_forward.1} parent=11 // pred_fallthru
        _
      // Predicated region
      $region49: #{pointnet_forward.1} parent=11 // pred_check
        %p337 = pneg %p267
      $region50: #{pointnet_forward.1} parent=11 // pred_check_branch
        %339 = sbr.rel (%p337) target = $region52
      $region51: #{pointnet_forward.1} parent=11 // pred_region
        _
      $region52: #{pointnet_forward.1} parent=11 // pred_fallthru
        _
    $region12: #{pointnet_forward.1} parent=5 // pred_fallthru
      _
    %p340 = scmp.lt.s32.totalorder %s17, 2
    // Predicated region
    $region53: #{pointnet_forward.1} parent=5 // pred_check
      %p341 = pneg %p340
    $region54: #{pointnet_forward.1} parent=5 // pred_check_branch
      %343 = sbr.rel (%p341) target = $region56
    $region55: #{pointnet_forward.1} parent=5 // pred_region
      // Predicated region
      $region57: #{pointnet_forward.1} parent=55 // pred_check
        %p344 = pneg %p51
      $region58: #{pointnet_forward.1} parent=55 // pred_check_branch
        %346 = sbr.rel (%p344) target = $region60
      $region59: #{pointnet_forward.1} parent=55 // pred_region
        %p347 = scmp.lt.s32.totalorder %s24, 1
        %s348 = scalar_select %p347, %s24, 1
        %p349 = scmp.lt.s32.totalorder %s25, 0
        %s350 = scalar_select %p349, %s25, 0
        %s351 = sadd.s32 %s350, %s348
        %s352 = smul.addr %s351, 8
        %s353 = scalar_lea.vmem %s0, %s352
      $region60: #{pointnet_forward.1} parent=55 // pred_fallthru
        _
    $region56: #{pointnet_forward.1} parent=5 // pred_fallthru
      _
    %p354 = scmp.le.s32.totalorder 1, %s17
    %p355 = scmp.lt.s32.totalorder %s17, 3
    %p356 = pnand %p354, %p355
    %p357 = pneg %p356
    // Predicated region
    $region61: #{pointnet_forward.1} parent=5 // pred_check
      _
    $region62: #{pointnet_forward.1} parent=5 // pred_check_branch
      %359 = sbr.rel (%p356) target = $region64
    $region63: #{pointnet_forward.1} parent=5 // pred_region
      %s360 = ssub.s32 %s17, 1
      %p361 = scmp.lt.s32.totalorder %s26, 1
      %s362 = scalar_select %p361, %s26, 1
      %p363 = scmp.lt.s32.totalorder %s27, 0
      %s364 = scalar_select %p363, %s27, 0
      %s365 = sadd.s32 %s364, %s362
      %s366 = smul.addr %s365, 8
      %s367 = scalar_lea.vmem %s0, %s366
      %p368 = pneg %p57
      %p369 = pneg %p54
      %p370 = pneg %p78
      %p371 = pneg %p75
      %p372 = pneg %p99
      %p373 = pneg %p96
      %p374 = pneg %p120
      %p375 = pneg %p117
      %p376 = pneg %p141
      %p377 = pneg %p138
      %p378 = pneg %p162
      %p379 = pneg %p159
      %p380 = pneg %p183
      %p381 = pneg %p180
      %p382 = pneg %p204
      %p383 = pneg %p201
      %p384 = pneg %p225
      %p385 = pneg %p222
      %p386 = pneg %p246
      %p387 = pneg %p243
      %p388 = pneg %p267
      %p389 = pneg %p264
      %p390 = pneg %p295
      %p391 = pneg %p292
      %p392 = scmp.lt.s32.totalorder %s26, 1
      %s393 = scalar_select %p392, %s26, 1
      %p394 = scmp.lt.s32.totalorder %s27, 0
      %s395 = scalar_select %p394, %s27, 0
      %s396 = smul.addr %s393, 128
      %s397 = sadd.s32 %s395, %s396
      %s398 = smul.addr %s397, 8
      %s399 = scalar_lea.vmem %s11, %s398
      %p400 = scmp.lt.s32.totalorder %s26, 1
      %s401 = scalar_select %p400, %s26, 1
      %p402 = scmp.lt.s32.totalorder %s27, 0
      %s403 = scalar_select %p402, %s27, 0
      %s404 = sadd.s32 %s403, %s401
      %s405 = smul.addr %s404, 8
      %s406 = scalar_lea.vmem %s0, %s405
      %p407 = scmp.lt.s32.totalorder %s26, 1
      %s408 = scalar_select %p407, %s26, 1
      %p409 = scmp.lt.s32.totalorder %s27, 0
      %s410 = scalar_select %p409, %s27, 0
      %s411 = smul.addr %s408, 128
      %s412 = sadd.s32 %s410, %s411
      %s413 = smul.addr %s412, 8
      %s414 = scalar_lea.vmem %s11, %s413
      %v416 = vld [vmem:[%s406] sm:$0xff]
      %v417 = vld [vmem:[%s1] sm:$0xff]
      %v418 = vld [vmem:[%s1 + $0x8] sm:$0xff]
      %v419 = vld [vmem:[%s1 + $0x10] sm:$0xff]
      %v420 = vld [vmem:[%s1 + $0x18] sm:$0xff]
      %v421 = vld [vmem:[%s1 + $0x20] sm:$0xff]
      %v422 = vld [vmem:[%s1 + $0x28] sm:$0xff]
      %v423 = vld [vmem:[%s1 + $0x30] sm:$0xff]
      %v424 = vld [vmem:[%s1 + $0x38] sm:$0xff]
      %426 = vset.pattern.permute.xlu0 0
      %427 = vperm.xlu0 %426, %v417
      %v428 = vpop.permute.xlu0 %427
      %431 = vset.pattern.permute.xlu0 0
      %432 = vperm.xlu0 %431, %v418
      %v433 = vpop.permute.xlu0 %432
      %436 = vset.pattern.permute.xlu0 0
      %437 = vperm.xlu0 %436, %v419
      %v438 = vpop.permute.xlu0 %437
      %441 = vset.pattern.permute.xlu0 0
      %442 = vperm.xlu0 %441, %v420
      %v443 = vpop.permute.xlu0 %442
      %446 = vset.pattern.permute.xlu0 0
      %447 = vperm.xlu0 %446, %v421
      %v448 = vpop.permute.xlu0 %447
      %451 = vset.pattern.permute.xlu0 0
      %452 = vperm.xlu0 %451, %v422
      %v453 = vpop.permute.xlu0 %452
      %456 = vset.pattern.permute.xlu0 0
      %457 = vperm.xlu0 %456, %v423
      %v458 = vpop.permute.xlu0 %457
      %461 = vset.pattern.permute.xlu0 0
      %462 = vperm.xlu0 %461, %v424
      %v463 = vpop.permute.xlu0 %462
      %v465 = vperm.slane %v416, 0
      %v466 = vmul.f32 %v428, %v465
      %v467 = vmul.f32 %v433, %v465
      %v468 = vmul.f32 %v438, %v465
      %v469 = vmul.f32 %v443, %v465
      %v470 = vmul.f32 %v448, %v465
      %v471 = vmul.f32 %v453, %v465
      %v472 = vmul.f32 %v458, %v465
      %v473 = vmul.f32 %v463, %v465
      %474 = vset.pattern.permute.xlu0 1
      %475 = vperm.xlu0 %474, %v417
      %v476 = vpop.permute.xlu0 %475
      %478 = vset.pattern.permute.xlu0 1
      %479 = vperm.xlu0 %478, %v418
      %v480 = vpop.permute.xlu0 %479
      %482 = vset.pattern.permute.xlu0 1
      %483 = vperm.xlu0 %482, %v419
      %v484 = vpop.permute.xlu0 %483
      %486 = vset.pattern.permute.xlu0 1
      %487 = vperm.xlu0 %486, %v420
      %v488 = vpop.permute.xlu0 %487
      %490 = vset.pattern.permute.xlu0 1
      %491 = vperm.xlu0 %490, %v421
      %v492 = vpop.permute.xlu0 %491
      %494 = vset.pattern.permute.xlu0 1
      %495 = vperm.xlu0 %494, %v422
      %v496 = vpop.permute.xlu0 %495
      %498 = vset.pattern.permute.xlu0 1
      %499 = vperm.xlu0 %498, %v423
      %v500 = vpop.permute.xlu0 %499
      %502 = vset.pattern.permute.xlu0 1
      %503 = vperm.xlu0 %502, %v424
      %v504 = vpop.permute.xlu0 %503
      %v506 = vperm.slane %v416, 1
      %v507 = vmul.f32 %v476, %v506
      %v508 = vmul.f32 %v480, %v506
      %v509 = vmul.f32 %v484, %v506
      %v510 = vmul.f32 %v488, %v506
      %v511 = vmul.f32 %v492, %v506
      %v512 = vmul.f32 %v496, %v506
      %v513 = vmul.f32 %v500, %v506
      %v514 = vmul.f32 %v504, %v506
      %v515 = vadd.f32 %v466, %v507
      %v516 = vadd.f32 %v467, %v508
      %v517 = vadd.f32 %v468, %v509
      %v518 = vadd.f32 %v469, %v510
      %v519 = vadd.f32 %v470, %v511
      %v520 = vadd.f32 %v471, %v512
      %v521 = vadd.f32 %v472, %v513
      %v522 = vadd.f32 %v473, %v514
      %523 = vset.pattern.permute.xlu0 2
      %524 = vperm.xlu0 %523, %v417
      %v525 = vpop.permute.xlu0 %524
      %527 = vset.pattern.permute.xlu0 2
      %528 = vperm.xlu0 %527, %v418
      %v529 = vpop.permute.xlu0 %528
      %531 = vset.pattern.permute.xlu0 2
      %532 = vperm.xlu0 %531, %v419
      %v533 = vpop.permute.xlu0 %532
      %535 = vset.pattern.permute.xlu0 2
      %536 = vperm.xlu0 %535, %v420
      %v537 = vpop.permute.xlu0 %536
      %539 = vset.pattern.permute.xlu0 2
      %540 = vperm.xlu0 %539, %v421
      %v541 = vpop.permute.xlu0 %540
      %543 = vset.pattern.permute.xlu0 2
      %544 = vperm.xlu0 %543, %v422
      %v545 = vpop.permute.xlu0 %544
      %547 = vset.pattern.permute.xlu0 2
      %548 = vperm.xlu0 %547, %v423
      %v549 = vpop.permute.xlu0 %548
      %551 = vset.pattern.permute.xlu0 2
      %552 = vperm.xlu0 %551, %v424
      %v553 = vpop.permute.xlu0 %552
      %v555 = vperm.slane %v416, 2
      %v556 = vmul.f32 %v525, %v555
      %v557 = vmul.f32 %v529, %v555
      %v558 = vmul.f32 %v533, %v555
      %v559 = vmul.f32 %v537, %v555
      %v560 = vmul.f32 %v541, %v555
      %v561 = vmul.f32 %v545, %v555
      %v562 = vmul.f32 %v549, %v555
      %v563 = vmul.f32 %v553, %v555
      %v564 = vadd.f32 %v515, %v556
      %v565 = vadd.f32 %v516, %v557
      %v566 = vadd.f32 %v517, %v558
      %v567 = vadd.f32 %v518, %v559
      %v568 = vadd.f32 %v519, %v560
      %v569 = vadd.f32 %v520, %v561
      %v570 = vadd.f32 %v521, %v562
      %v571 = vadd.f32 %v522, %v563
      %v572 = vld [vmem:[%s2] sm:$0xff]
      %v573 = vld [vmem:[%s2 + $0x8] sm:$0xff]
      %v574 = vld [vmem:[%s2 + $0x10] sm:$0xff]
      %v575 = vld [vmem:[%s2 + $0x18] sm:$0xff]
      %v576 = vld [vmem:[%s2 + $0x20] sm:$0xff]
      %v577 = vld [vmem:[%s2 + $0x28] sm:$0xff]
      %v578 = vld [vmem:[%s2 + $0x30] sm:$0xff]
      %v579 = vld [vmem:[%s2 + $0x38] sm:$0xff]
      %581 = vset.pattern.permute.xlu0 0
      %582 = vperm.xlu0 %581, %v572
      %v583 = vpop.permute.xlu0 %582
      %586 = vset.pattern.permute.xlu0 0
      %587 = vperm.xlu0 %586, %v573
      %v588 = vpop.permute.xlu0 %587
      %591 = vset.pattern.permute.xlu0 0
      %592 = vperm.xlu0 %591, %v574
      %v593 = vpop.permute.xlu0 %592
      %596 = vset.pattern.permute.xlu0 0
      %597 = vperm.xlu0 %596, %v575
      %v598 = vpop.permute.xlu0 %597
      %601 = vset.pattern.permute.xlu0 0
      %602 = vperm.xlu0 %601, %v576
      %v603 = vpop.permute.xlu0 %602
      %606 = vset.pattern.permute.xlu0 0
      %607 = vperm.xlu0 %606, %v577
      %v608 = vpop.permute.xlu0 %607
      %611 = vset.pattern.permute.xlu0 0
      %612 = vperm.xlu0 %611, %v578
      %v613 = vpop.permute.xlu0 %612
      %616 = vset.pattern.permute.xlu0 0
      %617 = vperm.xlu0 %616, %v579
      %v618 = vpop.permute.xlu0 %617
      %v620 = vadd.f32 %v564, %v583
      %v621 = vadd.f32 %v565, %v588
      %v622 = vadd.f32 %v566, %v593
      %v623 = vadd.f32 %v567, %v598
      %v624 = vadd.f32 %v568, %v603
      %v625 = vadd.f32 %v569, %v608
      %v626 = vadd.f32 %v570, %v613
      %v627 = vadd.f32 %v571, %v618
      %v628 = vmax.f32 %v620, 0.0
      %v629 = vmax.f32 %v621, 0.0
      %v630 = vmax.f32 %v622, 0.0
      %v631 = vmax.f32 %v623, 0.0
      %v632 = vmax.f32 %v624, 0.0
      %v633 = vmax.f32 %v625, 0.0
      %v634 = vmax.f32 %v626, 0.0
      %v635 = vmax.f32 %v627, 0.0
      %v636 = vpack.c.bf16 %v629, %v628
      %v637 = vpack.c.bf16 %v631, %v630
      %v638 = vpack.c.bf16 %v633, %v632
      %v639 = vpack.c.bf16 %v635, %v634
      %v640 = vld [vmem:[%s3] sm:$0xf]
      %v641 = vld [vmem:[%s3 + $0x4] sm:$0xf]
      %v642 = vld [vmem:[%s3 + $0x8] sm:$0xf]
      %v643 = vld [vmem:[%s3 + $0xc] sm:$0xf]
      %v644 = vld [vmem:[%s3 + $0x10] sm:$0xf]
      %v645 = vld [vmem:[%s3 + $0x14] sm:$0xf]
      %v646 = vld [vmem:[%s3 + $0x18] sm:$0xf]
      %v647 = vld [vmem:[%s3 + $0x1c] sm:$0xf]
      %v648 = vld [vmem:[%s4] sm:$0xff]
      %v649 = vld [vmem:[%s4 + $0x8] sm:$0xff]
      %v650 = vld [vmem:[%s4 + $0x10] sm:$0xff]
      %v651 = vld [vmem:[%s4 + $0x18] sm:$0xff]
      %v652 = vld [vmem:[%s4 + $0x20] sm:$0xff]
      %v653 = vld [vmem:[%s4 + $0x28] sm:$0xff]
      %v654 = vld [vmem:[%s4 + $0x30] sm:$0xff]
      %v655 = vld [vmem:[%s4 + $0x38] sm:$0xff]
      %657 = vset.pattern.permute.xlu0 0
      %658 = vperm.xlu0 %657, %v648
      %v659 = vpop.permute.xlu0 %658
      %662 = vset.pattern.permute.xlu0 0
      %663 = vperm.xlu0 %662, %v649
      %v664 = vpop.permute.xlu0 %663
      %667 = vset.pattern.permute.xlu0 0
      %668 = vperm.xlu0 %667, %v650
      %v669 = vpop.permute.xlu0 %668
      %672 = vset.pattern.permute.xlu0 0
      %673 = vperm.xlu0 %672, %v651
      %v674 = vpop.permute.xlu0 %673
      %677 = vset.pattern.permute.xlu0 0
      %678 = vperm.xlu0 %677, %v652
      %v679 = vpop.permute.xlu0 %678
      %682 = vset.pattern.permute.xlu0 0
      %683 = vperm.xlu0 %682, %v653
      %v684 = vpop.permute.xlu0 %683
      %687 = vset.pattern.permute.xlu0 0
      %688 = vperm.xlu0 %687, %v654
      %v689 = vpop.permute.xlu0 %688
      %692 = vset.pattern.permute.xlu0 0
      %693 = vperm.xlu0 %692, %v655
      %v694 = vpop.permute.xlu0 %693
      %v704 = vunpack.c.l.b16 %v640
      %v705 = vunpack.c.l.b16 %v641
      %v706 = vunpack.c.l.b16 %v642
      %v707 = vunpack.c.l.b16 %v643
      %v708 = vunpack.c.l.b16 %v644
      %v709 = vunpack.c.l.b16 %v645
      %v710 = vunpack.c.l.b16 %v646
      %v711 = vunpack.c.l.b16 %v647
      %v712 = vpack.c.b16 %v705, %v704
      %v713 = vpack.c.b16 %v707, %v706
      %v714 = vpack.c.b16 %v709, %v708
      %v715 = vpack.c.b16 %v711, %v710
      %vm716 = vcmask 523264
      %v718 = vsel %vm716, %v712, 0
      %v721 = vsel %vm716, %v713, 0
      %v724 = vsel %vm716, %v714, 0
      %v727 = vsel %vm716, %v715, 0
      %729 = vmatpush.bf16.msra.mxu0 0
      %730 = vmatpush.bf16.msra.mxu0 0
      %731 = vmatpush.bf16.msra.mxu0 0
      %732 = vmatpush.bf16.msra.mxu0 0
      %733 = vmatpush.bf16.msra.mxu0 %v639
      %734 = vmatpush.bf16.msra.mxu0 %v638
      %735 = vmatpush.bf16.msra.mxu0 %v637
      %736 = vmatpush.bf16.msra.mxu0 %v636
      %737 = vmatmul.bf16.gmra.mxu0 %v718
      %v738 = vpop.f32.mrf.mxu0
      %v739 = vadd.f32 %v659, %v738
      %v740 = vpop.f32.mrf.mxu0
      %v741 = vadd.f32 %v664, %v740
      %742 = vmatmul.bf16.gmra.mxu0 %v721
      %v743 = vpop.f32.mrf.mxu0
      %v744 = vadd.f32 %v669, %v743
      %v745 = vpop.f32.mrf.mxu0
      %v746 = vadd.f32 %v674, %v745
      %747 = vmatmul.bf16.gmra.mxu0 %v724
      %v748 = vpop.f32.mrf.mxu0
      %v749 = vadd.f32 %v679, %v748
      %v750 = vpop.f32.mrf.mxu0
      %v751 = vadd.f32 %v684, %v750
      %752 = vmatmul.bf16.gmra.mxu0 %v727
      %v753 = vpop.f32.mrf.mxu0
      %v754 = vadd.f32 %v689, %v753
      %v755 = vpop.f32.mrf.mxu0
      %v756 = vadd.f32 %v694, %v755
      %757 = vdwg.mxu0
      %v758 = vmax.f32 %v739, 0.0
      %v759 = vmax.f32 %v741, 0.0
      %v760 = vmax.f32 %v744, 0.0
      %v761 = vmax.f32 %v746, 0.0
      %v762 = vmax.f32 %v749, 0.0
      %v763 = vmax.f32 %v751, 0.0
      %v764 = vmax.f32 %v754, 0.0
      %v765 = vmax.f32 %v756, 0.0
      %v766 = vpack.c.bf16 %v759, %v758
      %v767 = vpack.c.bf16 %v761, %v760
      %v768 = vpack.c.bf16 %v763, %v762
      %v769 = vpack.c.bf16 %v765, %v764
      %v770 = vld [vmem:[%s5] sm:$0xf]
      %v771 = vld [vmem:[%s5 + $0x4] sm:$0xf]
      %v772 = vld [vmem:[%s5 + $0x8] sm:$0xf]
      %v773 = vld [vmem:[%s5 + $0xc] sm:$0xf]
      %v774 = vld [vmem:[%s5 + $0x10] sm:$0xf]
      %v775 = vld [vmem:[%s5 + $0x14] sm:$0xf]
      %v776 = vld [vmem:[%s5 + $0x18] sm:$0xf]
      %v777 = vld [vmem:[%s5 + $0x1c] sm:$0xf]
      %v778 = vld [vmem:[%s6] sm:$0xff]
      %v779 = vld [vmem:[%s6 + $0x8] sm:$0xff]
      %v780 = vld [vmem:[%s6 + $0x10] sm:$0xff]
      %v781 = vld [vmem:[%s6 + $0x18] sm:$0xff]
      %v782 = vld [vmem:[%s6 + $0x20] sm:$0xff]
      %v783 = vld [vmem:[%s6 + $0x28] sm:$0xff]
      %v784 = vld [vmem:[%s6 + $0x30] sm:$0xff]
      %v785 = vld [vmem:[%s6 + $0x38] sm:$0xff]
      %787 = vset.pattern.permute.xlu0 0
      %788 = vperm.xlu0 %787, %v778
      %v789 = vpop.permute.xlu0 %788
      %792 = vset.pattern.permute.xlu0 0
      %793 = vperm.xlu0 %792, %v779
      %v794 = vpop.permute.xlu0 %793
      %797 = vset.pattern.permute.xlu0 0
      %798 = vperm.xlu0 %797, %v780
      %v799 = vpop.permute.xlu0 %798
      %802 = vset.pattern.permute.xlu0 0
      %803 = vperm.xlu0 %802, %v781
      %v804 = vpop.permute.xlu0 %803
      %807 = vset.pattern.permute.xlu0 0
      %808 = vperm.xlu0 %807, %v782
      %v809 = vpop.permute.xlu0 %808
      %812 = vset.pattern.permute.xlu0 0
      %813 = vperm.xlu0 %812, %v783
      %v814 = vpop.permute.xlu0 %813
      %817 = vset.pattern.permute.xlu0 0
      %818 = vperm.xlu0 %817, %v784
      %v819 = vpop.permute.xlu0 %818
      %822 = vset.pattern.permute.xlu0 0
      %823 = vperm.xlu0 %822, %v785
      %v824 = vpop.permute.xlu0 %823
      %v834 = vunpack.c.l.b16 %v770
      %v835 = vunpack.c.l.b16 %v771
      %v836 = vunpack.c.l.b16 %v772
      %v837 = vunpack.c.l.b16 %v773
      %v838 = vunpack.c.l.b16 %v774
      %v839 = vunpack.c.l.b16 %v775
      %v840 = vunpack.c.l.b16 %v776
      %v841 = vunpack.c.l.b16 %v777
      %v842 = vpack.c.b16 %v835, %v834
      %v843 = vpack.c.b16 %v837, %v836
      %v844 = vpack.c.b16 %v839, %v838
      %v845 = vpack.c.b16 %v841, %v840
      %v847 = vsel %vm716, %v842, 0
      %v850 = vsel %vm716, %v843, 0
      %v853 = vsel %vm716, %v844, 0
      %v856 = vsel %vm716, %v845, 0
      %858 = vmatpush.bf16.msra.mxu0 0
      %859 = vmatpush.bf16.msra.mxu0 0
      %860 = vmatpush.bf16.msra.mxu0 0
      %861 = vmatpush.bf16.msra.mxu0 0
      %862 = vmatpush.bf16.msra.mxu0 %v769
      %863 = vmatpush.bf16.msra.mxu0 %v768
      %864 = vmatpush.bf16.msra.mxu0 %v767
      %865 = vmatpush.bf16.msra.mxu0 %v766
      %866 = vmatmul.bf16.gmra.mxu0 %v847
      %v867 = vpop.f32.mrf.mxu0
      %v868 = vadd.f32 %v789, %v867
      %v869 = vpop.f32.mrf.mxu0
      %v870 = vadd.f32 %v794, %v869
      %871 = vmatmul.bf16.gmra.mxu0 %v850
      %v872 = vpop.f32.mrf.mxu0
      %v873 = vadd.f32 %v799, %v872
      %v874 = vpop.f32.mrf.mxu0
      %v875 = vadd.f32 %v804, %v874
      %876 = vmatmul.bf16.gmra.mxu0 %v853
      %v877 = vpop.f32.mrf.mxu0
      %v878 = vadd.f32 %v809, %v877
      %v879 = vpop.f32.mrf.mxu0
      %v880 = vadd.f32 %v814, %v879
      %881 = vmatmul.bf16.gmra.mxu0 %v856
      %v882 = vpop.f32.mrf.mxu0
      %v883 = vadd.f32 %v819, %v882
      %v884 = vpop.f32.mrf.mxu0
      %v885 = vadd.f32 %v824, %v884
      %886 = vdwg.mxu0
      %v887 = vmax.f32 %v868, 0.0
      %v888 = vmax.f32 %v870, 0.0
      %v889 = vmax.f32 %v873, 0.0
      %v890 = vmax.f32 %v875, 0.0
      %v891 = vmax.f32 %v878, 0.0
      %v892 = vmax.f32 %v880, 0.0
      %v893 = vmax.f32 %v883, 0.0
      %v894 = vmax.f32 %v885, 0.0
      %v895 = vpack.c.bf16 %v888, %v887
      %v896 = vpack.c.bf16 %v890, %v889
      %v897 = vpack.c.bf16 %v892, %v891
      %v898 = vpack.c.bf16 %v894, %v893
      %v899 = vld [vmem:[%s7] sm:$0xf]
      %v900 = vld [vmem:[%s7 + $0x4] sm:$0xf]
      %v901 = vld [vmem:[%s7 + $0x8] sm:$0xf]
      %v902 = vld [vmem:[%s7 + $0xc] sm:$0xf]
      %v903 = vld [vmem:[%s7 + $0x10] sm:$0xf]
      %v904 = vld [vmem:[%s7 + $0x14] sm:$0xf]
      %v905 = vld [vmem:[%s7 + $0x18] sm:$0xf]
      %v906 = vld [vmem:[%s7 + $0x1c] sm:$0xf]
      %v907 = vld [vmem:[%s7 + $0x20] sm:$0xf]
      %v908 = vld [vmem:[%s7 + $0x24] sm:$0xf]
      %v909 = vld [vmem:[%s7 + $0x28] sm:$0xf]
      %v910 = vld [vmem:[%s7 + $0x2c] sm:$0xf]
      %v911 = vld [vmem:[%s7 + $0x30] sm:$0xf]
      %v912 = vld [vmem:[%s7 + $0x34] sm:$0xf]
      %v913 = vld [vmem:[%s7 + $0x38] sm:$0xf]
      %v914 = vld [vmem:[%s7 + $0x3c] sm:$0xf]
      %v915 = vld [vmem:[%s8] sm:$0xff]
      %v916 = vld [vmem:[%s8 + $0x8] sm:$0xff]
      %v917 = vld [vmem:[%s8 + $0x10] sm:$0xff]
      %v918 = vld [vmem:[%s8 + $0x18] sm:$0xff]
      %v919 = vld [vmem:[%s8 + $0x20] sm:$0xff]
      %v920 = vld [vmem:[%s8 + $0x28] sm:$0xff]
      %v921 = vld [vmem:[%s8 + $0x30] sm:$0xff]
      %v922 = vld [vmem:[%s8 + $0x38] sm:$0xff]
      %v923 = vld [vmem:[%s8 + $0x40] sm:$0xff]
      %v924 = vld [vmem:[%s8 + $0x48] sm:$0xff]
      %v925 = vld [vmem:[%s8 + $0x50] sm:$0xff]
      %v926 = vld [vmem:[%s8 + $0x58] sm:$0xff]
      %v927 = vld [vmem:[%s8 + $0x60] sm:$0xff]
      %v928 = vld [vmem:[%s8 + $0x68] sm:$0xff]
      %v929 = vld [vmem:[%s8 + $0x70] sm:$0xff]
      %v930 = vld [vmem:[%s8 + $0x78] sm:$0xff]
      %932 = vset.pattern.permute.xlu0 0
      %933 = vperm.xlu0 %932, %v915
      %v934 = vpop.permute.xlu0 %933
      %937 = vset.pattern.permute.xlu0 0
      %938 = vperm.xlu0 %937, %v916
      %v939 = vpop.permute.xlu0 %938
      %942 = vset.pattern.permute.xlu0 0
      %943 = vperm.xlu0 %942, %v917
      %v944 = vpop.permute.xlu0 %943
      %947 = vset.pattern.permute.xlu0 0
      %948 = vperm.xlu0 %947, %v918
      %v949 = vpop.permute.xlu0 %948
      %952 = vset.pattern.permute.xlu0 0
      %953 = vperm.xlu0 %952, %v919
      %v954 = vpop.permute.xlu0 %953
      %957 = vset.pattern.permute.xlu0 0
      %958 = vperm.xlu0 %957, %v920
      %v959 = vpop.permute.xlu0 %958
      %962 = vset.pattern.permute.xlu0 0
      %963 = vperm.xlu0 %962, %v921
      %v964 = vpop.permute.xlu0 %963
      %967 = vset.pattern.permute.xlu0 0
      %968 = vperm.xlu0 %967, %v922
      %v969 = vpop.permute.xlu0 %968
      %972 = vset.pattern.permute.xlu0 0
      %973 = vperm.xlu0 %972, %v923
      %v974 = vpop.permute.xlu0 %973
      %977 = vset.pattern.permute.xlu0 0
      %978 = vperm.xlu0 %977, %v924
      %v979 = vpop.permute.xlu0 %978
      %982 = vset.pattern.permute.xlu0 0
      %983 = vperm.xlu0 %982, %v925
      %v984 = vpop.permute.xlu0 %983
      %987 = vset.pattern.permute.xlu0 0
      %988 = vperm.xlu0 %987, %v926
      %v989 = vpop.permute.xlu0 %988
      %992 = vset.pattern.permute.xlu0 0
      %993 = vperm.xlu0 %992, %v927
      %v994 = vpop.permute.xlu0 %993
      %997 = vset.pattern.permute.xlu0 0
      %998 = vperm.xlu0 %997, %v928
      %v999 = vpop.permute.xlu0 %998
      %1002 = vset.pattern.permute.xlu0 0
      %1003 = vperm.xlu0 %1002, %v929
      %v1004 = vpop.permute.xlu0 %1003
      %1007 = vset.pattern.permute.xlu0 0
      %1008 = vperm.xlu0 %1007, %v930
      %v1009 = vpop.permute.xlu0 %1008
      %v1027 = vunpack.c.l.b16 %v899
      %v1028 = vunpack.c.l.b16 %v900
      %v1029 = vunpack.c.l.b16 %v901
      %v1030 = vunpack.c.l.b16 %v902
      %v1031 = vunpack.c.l.b16 %v903
      %v1032 = vunpack.c.l.b16 %v904
      %v1033 = vunpack.c.l.b16 %v905
      %v1034 = vunpack.c.l.b16 %v906
      %v1035 = vunpack.c.l.b16 %v907
      %v1036 = vunpack.c.l.b16 %v908
      %v1037 = vunpack.c.l.b16 %v909
      %v1038 = vunpack.c.l.b16 %v910
      %v1039 = vunpack.c.l.b16 %v911
      %v1040 = vunpack.c.l.b16 %v912
      %v1041 = vunpack.c.l.b16 %v913
      %v1042 = vunpack.c.l.b16 %v914
      %v1043 = vpack.c.b16 %v1028, %v1027
      %v1044 = vpack.c.b16 %v1030, %v1029
      %v1045 = vpack.c.b16 %v1032, %v1031
      %v1046 = vpack.c.b16 %v1034, %v1033
      %v1047 = vpack.c.b16 %v1036, %v1035
      %v1048 = vpack.c.b16 %v1038, %v1037
      %v1049 = vpack.c.b16 %v1040, %v1039
      %v1050 = vpack.c.b16 %v1042, %v1041
      %v1052 = vsel %vm716, %v1043, 0
      %v1055 = vsel %vm716, %v1044, 0
      %v1058 = vsel %vm716, %v1045, 0
      %v1061 = vsel %vm716, %v1046, 0
      %v1064 = vsel %vm716, %v1047, 0
      %v1067 = vsel %vm716, %v1048, 0
      %v1070 = vsel %vm716, %v1049, 0
      %v1073 = vsel %vm716, %v1050, 0
      %1075 = vmatpush.bf16.msra.mxu0 0
      %1076 = vmatpush.bf16.msra.mxu0 0
      %1077 = vmatpush.bf16.msra.mxu0 0
      %1078 = vmatpush.bf16.msra.mxu0 0
      %1079 = vmatpush.bf16.msra.mxu0 %v898
      %1080 = vmatpush.bf16.msra.mxu0 %v897
      %1081 = vmatpush.bf16.msra.mxu0 %v896
      %1082 = vmatpush.bf16.msra.mxu0 %v895
      %1083 = vmatmul.bf16.gmra.mxu0 %v1052
      %v1084 = vpop.f32.mrf.mxu0
      %v1085 = vadd.f32 %v934, %v1084
      %v1086 = vpop.f32.mrf.mxu0
      %v1087 = vadd.f32 %v939, %v1086
      %1088 = vmatmul.bf16.gmra.mxu0 %v1055
      %v1089 = vpop.f32.mrf.mxu0
      %v1090 = vadd.f32 %v944, %v1089
      %v1091 = vpop.f32.mrf.mxu0
      %v1092 = vadd.f32 %v949, %v1091
      %1093 = vmatmul.bf16.gmra.mxu0 %v1058
      %v1094 = vpop.f32.mrf.mxu0
      %v1095 = vadd.f32 %v954, %v1094
      %v1096 = vpop.f32.mrf.mxu0
      %v1097 = vadd.f32 %v959, %v1096
      %1098 = vmatmul.bf16.gmra.mxu0 %v1061
      %v1099 = vpop.f32.mrf.mxu0
      %v1100 = vadd.f32 %v964, %v1099
      %v1101 = vpop.f32.mrf.mxu0
      %v1102 = vadd.f32 %v969, %v1101
      %1103 = vmatmul.bf16.gmra.mxu0 %v1064
      %v1104 = vpop.f32.mrf.mxu0
      %v1105 = vadd.f32 %v974, %v1104
      %v1106 = vpop.f32.mrf.mxu0
      %v1107 = vadd.f32 %v979, %v1106
      %1108 = vmatmul.bf16.gmra.mxu0 %v1067
      %v1109 = vpop.f32.mrf.mxu0
      %v1110 = vadd.f32 %v984, %v1109
      %v1111 = vpop.f32.mrf.mxu0
      %v1112 = vadd.f32 %v989, %v1111
      %1113 = vmatmul.bf16.gmra.mxu0 %v1070
      %v1114 = vpop.f32.mrf.mxu0
      %v1115 = vadd.f32 %v994, %v1114
      %v1116 = vpop.f32.mrf.mxu0
      %v1117 = vadd.f32 %v999, %v1116
      %1118 = vmatmul.bf16.gmra.mxu0 %v1073
      %v1119 = vpop.f32.mrf.mxu0
      %v1120 = vadd.f32 %v1004, %v1119
      %v1121 = vpop.f32.mrf.mxu0
      %v1122 = vadd.f32 %v1009, %v1121
      %1123 = vdwg.mxu0
      %v1124 = vmax.f32 %v1085, 0.0
      %v1125 = vmax.f32 %v1087, 0.0
      %v1126 = vmax.f32 %v1090, 0.0
      %v1127 = vmax.f32 %v1092, 0.0
      %v1128 = vmax.f32 %v1095, 0.0
      %v1129 = vmax.f32 %v1097, 0.0
      %v1130 = vmax.f32 %v1100, 0.0
      %v1131 = vmax.f32 %v1102, 0.0
      %v1132 = vmax.f32 %v1105, 0.0
      %v1133 = vmax.f32 %v1107, 0.0
      %v1134 = vmax.f32 %v1110, 0.0
      %v1135 = vmax.f32 %v1112, 0.0
      %v1136 = vmax.f32 %v1115, 0.0
      %v1137 = vmax.f32 %v1117, 0.0
      %v1138 = vmax.f32 %v1120, 0.0
      %v1139 = vmax.f32 %v1122, 0.0
      %v1140 = vpack.c.bf16 %v1125, %v1124
      %v1141 = vpack.c.bf16 %v1127, %v1126
      %v1142 = vpack.c.bf16 %v1129, %v1128
      %v1143 = vpack.c.bf16 %v1131, %v1130
      %v1144 = vpack.c.bf16 %v1133, %v1132
      %v1145 = vpack.c.bf16 %v1135, %v1134
      %v1146 = vpack.c.bf16 %v1137, %v1136
      %v1147 = vpack.c.bf16 %v1139, %v1138
      %v1148 = vld [vmem:[%s9] sm:$0xf]
      %v1149 = vld [vmem:[%s9 + $0x4] sm:$0xf]
      %v1150 = vld [vmem:[%s9 + $0x8] sm:$0xf]
      %v1151 = vld [vmem:[%s9 + $0xc] sm:$0xf]
      %v1152 = vld [vmem:[%s9 + $0x10] sm:$0xf]
      %v1153 = vld [vmem:[%s9 + $0x14] sm:$0xf]
      %v1154 = vld [vmem:[%s9 + $0x18] sm:$0xf]
      %v1155 = vld [vmem:[%s9 + $0x1c] sm:$0xf]
      %v1156 = vld [vmem:[%s9 + $0x20] sm:$0xf]
      %v1157 = vld [vmem:[%s9 + $0x24] sm:$0xf]
      %v1158 = vld [vmem:[%s9 + $0x28] sm:$0xf]
      %v1159 = vld [vmem:[%s9 + $0x2c] sm:$0xf]
      %v1160 = vld [vmem:[%s9 + $0x30] sm:$0xf]
      %v1161 = vld [vmem:[%s9 + $0x34] sm:$0xf]
      %v1162 = vld [vmem:[%s9 + $0x38] sm:$0xf]
      %v1163 = vld [vmem:[%s9 + $0x3c] sm:$0xf]
      %v1164 = vld [vmem:[%s9 + $0x40] sm:$0xf]
      %v1165 = vld [vmem:[%s9 + $0x44] sm:$0xf]
      %v1166 = vld [vmem:[%s9 + $0x48] sm:$0xf]
      %v1167 = vld [vmem:[%s9 + $0x4c] sm:$0xf]
      %v1168 = vld [vmem:[%s9 + $0x50] sm:$0xf]
      %v1169 = vld [vmem:[%s9 + $0x54] sm:$0xf]
      %v1170 = vld [vmem:[%s9 + $0x58] sm:$0xf]
      %v1171 = vld [vmem:[%s9 + $0x5c] sm:$0xf]
      %v1172 = vld [vmem:[%s9 + $0x60] sm:$0xf]
      %v1173 = vld [vmem:[%s9 + $0x64] sm:$0xf]
      %v1174 = vld [vmem:[%s9 + $0x68] sm:$0xf]
      %v1175 = vld [vmem:[%s9 + $0x6c] sm:$0xf]
      %v1176 = vld [vmem:[%s9 + $0x70] sm:$0xf]
      %v1177 = vld [vmem:[%s9 + $0x74] sm:$0xf]
      %v1178 = vld [vmem:[%s9 + $0x78] sm:$0xf]
      %v1179 = vld [vmem:[%s9 + $0x7c] sm:$0xf]
      %v1180 = vld [vmem:[%s9 + $0x80] sm:$0xf]
      %v1181 = vld [vmem:[%s9 + $0x84] sm:$0xf]
      %v1182 = vld [vmem:[%s9 + $0x88] sm:$0xf]
      %v1183 = vld [vmem:[%s9 + $0x8c] sm:$0xf]
      %v1184 = vld [vmem:[%s9 + $0x90] sm:$0xf]
      %v1185 = vld [vmem:[%s9 + $0x94] sm:$0xf]
      %v1186 = vld [vmem:[%s9 + $0x98] sm:$0xf]
      %v1187 = vld [vmem:[%s9 + $0x9c] sm:$0xf]
      %v1188 = vld [vmem:[%s9 + $0xa0] sm:$0xf]
      %v1189 = vld [vmem:[%s9 + $0xa4] sm:$0xf]
      %v1190 = vld [vmem:[%s9 + $0xa8] sm:$0xf]
      %v1191 = vld [vmem:[%s9 + $0xac] sm:$0xf]
      %v1192 = vld [vmem:[%s9 + $0xb0] sm:$0xf]
      %v1193 = vld [vmem:[%s9 + $0xb4] sm:$0xf]
      %v1194 = vld [vmem:[%s9 + $0xb8] sm:$0xf]
      %v1195 = vld [vmem:[%s9 + $0xbc] sm:$0xf]
      %v1196 = vld [vmem:[%s9 + $0xc0] sm:$0xf]
      %v1197 = vld [vmem:[%s9 + $0xc4] sm:$0xf]
      %v1198 = vld [vmem:[%s9 + $0xc8] sm:$0xf]
      %v1199 = vld [vmem:[%s9 + $0xcc] sm:$0xf]
      %v1200 = vld [vmem:[%s9 + $0xd0] sm:$0xf]
      %v1201 = vld [vmem:[%s9 + $0xd4] sm:$0xf]
      %v1202 = vld [vmem:[%s9 + $0xd8] sm:$0xf]
      %v1203 = vld [vmem:[%s9 + $0xdc] sm:$0xf]
      %v1204 = vld [vmem:[%s9 + $0xe0] sm:$0xf]
      %v1205 = vld [vmem:[%s9 + $0xe4] sm:$0xf]
      %v1206 = vld [vmem:[%s9 + $0xe8] sm:$0xf]
      %v1207 = vld [vmem:[%s9 + $0xec] sm:$0xf]
      %v1208 = vld [vmem:[%s9 + $0xf0] sm:$0xf]
      %v1209 = vld [vmem:[%s9 + $0xf4] sm:$0xf]
      %v1210 = vld [vmem:[%s9 + $0xf8] sm:$0xf]
      %v1211 = vld [vmem:[%s9 + $0xfc] sm:$0xf]
      %v1212 = vld [vmem:[%s9 + $0x100] sm:$0xf]
      %v1213 = vld [vmem:[%s9 + $0x104] sm:$0xf]
      %v1214 = vld [vmem:[%s9 + $0x108] sm:$0xf]
      %v1215 = vld [vmem:[%s9 + $0x10c] sm:$0xf]
      %v1216 = vld [vmem:[%s9 + $0x110] sm:$0xf]
      %v1217 = vld [vmem:[%s9 + $0x114] sm:$0xf]
      %v1218 = vld [vmem:[%s9 + $0x118] sm:$0xf]
      %v1219 = vld [vmem:[%s9 + $0x11c] sm:$0xf]
      %v1220 = vld [vmem:[%s9 + $0x120] sm:$0xf]
      %v1221 = vld [vmem:[%s9 + $0x124] sm:$0xf]
      %v1222 = vld [vmem:[%s9 + $0x128] sm:$0xf]
      %v1223 = vld [vmem:[%s9 + $0x12c] sm:$0xf]
      %v1224 = vld [vmem:[%s9 + $0x130] sm:$0xf]
      %v1225 = vld [vmem:[%s9 + $0x134] sm:$0xf]
      %v1226 = vld [vmem:[%s9 + $0x138] sm:$0xf]
      %v1227 = vld [vmem:[%s9 + $0x13c] sm:$0xf]
      %v1228 = vld [vmem:[%s9 + $0x140] sm:$0xf]
      %v1229 = vld [vmem:[%s9 + $0x144] sm:$0xf]
      %v1230 = vld [vmem:[%s9 + $0x148] sm:$0xf]
      %v1231 = vld [vmem:[%s9 + $0x14c] sm:$0xf]
      %v1232 = vld [vmem:[%s9 + $0x150] sm:$0xf]
      %v1233 = vld [vmem:[%s9 + $0x154] sm:$0xf]
      %v1234 = vld [vmem:[%s9 + $0x158] sm:$0xf]
      %v1235 = vld [vmem:[%s9 + $0x15c] sm:$0xf]
      %v1236 = vld [vmem:[%s9 + $0x160] sm:$0xf]
      %v1237 = vld [vmem:[%s9 + $0x164] sm:$0xf]
      %v1238 = vld [vmem:[%s9 + $0x168] sm:$0xf]
      %v1239 = vld [vmem:[%s9 + $0x16c] sm:$0xf]
      %v1240 = vld [vmem:[%s9 + $0x170] sm:$0xf]
      %v1241 = vld [vmem:[%s9 + $0x174] sm:$0xf]
      %v1242 = vld [vmem:[%s9 + $0x178] sm:$0xf]
      %v1243 = vld [vmem:[%s9 + $0x17c] sm:$0xf]
      %v1244 = vld [vmem:[%s9 + $0x180] sm:$0xf]
      %v1245 = vld [vmem:[%s9 + $0x184] sm:$0xf]
      %v1246 = vld [vmem:[%s9 + $0x188] sm:$0xf]
      %v1247 = vld [vmem:[%s9 + $0x18c] sm:$0xf]
      %v1248 = vld [vmem:[%s9 + $0x190] sm:$0xf]
      %v1249 = vld [vmem:[%s9 + $0x194] sm:$0xf]
      %v1250 = vld [vmem:[%s9 + $0x198] sm:$0xf]
      %v1251 = vld [vmem:[%s9 + $0x19c] sm:$0xf]
      %v1252 = vld [vmem:[%s9 + $0x1a0] sm:$0xf]
      %v1253 = vld [vmem:[%s9 + $0x1a4] sm:$0xf]
      %v1254 = vld [vmem:[%s9 + $0x1a8] sm:$0xf]
      %v1255 = vld [vmem:[%s9 + $0x1ac] sm:$0xf]
      %v1256 = vld [vmem:[%s9 + $0x1b0] sm:$0xf]
      %v1257 = vld [vmem:[%s9 + $0x1b4] sm:$0xf]
      %v1258 = vld [vmem:[%s9 + $0x1b8] sm:$0xf]
      %v1259 = vld [vmem:[%s9 + $0x1bc] sm:$0xf]
      %v1260 = vld [vmem:[%s9 + $0x1c0] sm:$0xf]
      %v1261 = vld [vmem:[%s9 + $0x1c4] sm:$0xf]
      %v1262 = vld [vmem:[%s9 + $0x1c8] sm:$0xf]
      %v1263 = vld [vmem:[%s9 + $0x1cc] sm:$0xf]
      %v1264 = vld [vmem:[%s9 + $0x1d0] sm:$0xf]
      %v1265 = vld [vmem:[%s9 + $0x1d4] sm:$0xf]
      %v1266 = vld [vmem:[%s9 + $0x1d8] sm:$0xf]
      %v1267 = vld [vmem:[%s9 + $0x1dc] sm:$0xf]
      %v1268 = vld [vmem:[%s9 + $0x1e0] sm:$0xf]
      %v1269 = vld [vmem:[%s9 + $0x1e4] sm:$0xf]
      %v1270 = vld [vmem:[%s9 + $0x1e8] sm:$0xf]
      %v1271 = vld [vmem:[%s9 + $0x1ec] sm:$0xf]
      %v1272 = vld [vmem:[%s9 + $0x1f0] sm:$0xf]
      %v1273 = vld [vmem:[%s9 + $0x1f4] sm:$0xf]
      %v1274 = vld [vmem:[%s9 + $0x1f8] sm:$0xf]
      %v1275 = vld [vmem:[%s9 + $0x1fc] sm:$0xf]
      %v1276 = vld [vmem:[%s10] sm:$0xff]
      %v1277 = vld [vmem:[%s10 + $0x8] sm:$0xff]
      %v1278 = vld [vmem:[%s10 + $0x10] sm:$0xff]
      %v1279 = vld [vmem:[%s10 + $0x18] sm:$0xff]
      %v1280 = vld [vmem:[%s10 + $0x20] sm:$0xff]
      %v1281 = vld [vmem:[%s10 + $0x28] sm:$0xff]
      %v1282 = vld [vmem:[%s10 + $0x30] sm:$0xff]
      %v1283 = vld [vmem:[%s10 + $0x38] sm:$0xff]
      %v1284 = vld [vmem:[%s10 + $0x40] sm:$0xff]
      %v1285 = vld [vmem:[%s10 + $0x48] sm:$0xff]
      %v1286 = vld [vmem:[%s10 + $0x50] sm:$0xff]
      %v1287 = vld [vmem:[%s10 + $0x58] sm:$0xff]
      %v1288 = vld [vmem:[%s10 + $0x60] sm:$0xff]
      %v1289 = vld [vmem:[%s10 + $0x68] sm:$0xff]
      %v1290 = vld [vmem:[%s10 + $0x70] sm:$0xff]
      %v1291 = vld [vmem:[%s10 + $0x78] sm:$0xff]
      %v1292 = vld [vmem:[%s10 + $0x80] sm:$0xff]
      %v1293 = vld [vmem:[%s10 + $0x88] sm:$0xff]
      %v1294 = vld [vmem:[%s10 + $0x90] sm:$0xff]
      %v1295 = vld [vmem:[%s10 + $0x98] sm:$0xff]
      %v1296 = vld [vmem:[%s10 + $0xa0] sm:$0xff]
      %v1297 = vld [vmem:[%s10 + $0xa8] sm:$0xff]
      %v1298 = vld [vmem:[%s10 + $0xb0] sm:$0xff]
      %v1299 = vld [vmem:[%s10 + $0xb8] sm:$0xff]
      %v1300 = vld [vmem:[%s10 + $0xc0] sm:$0xff]
      %v1301 = vld [vmem:[%s10 + $0xc8] sm:$0xff]
      %v1302 = vld [vmem:[%s10 + $0xd0] sm:$0xff]
      %v1303 = vld [vmem:[%s10 + $0xd8] sm:$0xff]
      %v1304 = vld [vmem:[%s10 + $0xe0] sm:$0xff]
      %v1305 = vld [vmem:[%s10 + $0xe8] sm:$0xff]
      %v1306 = vld [vmem:[%s10 + $0xf0] sm:$0xff]
      %v1307 = vld [vmem:[%s10 + $0xf8] sm:$0xff]
      %v1308 = vld [vmem:[%s10 + $0x100] sm:$0xff]
      %v1309 = vld [vmem:[%s10 + $0x108] sm:$0xff]
      %v1310 = vld [vmem:[%s10 + $0x110] sm:$0xff]
      %v1311 = vld [vmem:[%s10 + $0x118] sm:$0xff]
      %v1312 = vld [vmem:[%s10 + $0x120] sm:$0xff]
      %v1313 = vld [vmem:[%s10 + $0x128] sm:$0xff]
      %v1314 = vld [vmem:[%s10 + $0x130] sm:$0xff]
      %v1315 = vld [vmem:[%s10 + $0x138] sm:$0xff]
      %v1316 = vld [vmem:[%s10 + $0x140] sm:$0xff]
      %v1317 = vld [vmem:[%s10 + $0x148] sm:$0xff]
      %v1318 = vld [vmem:[%s10 + $0x150] sm:$0xff]
      %v1319 = vld [vmem:[%s10 + $0x158] sm:$0xff]
      %v1320 = vld [vmem:[%s10 + $0x160] sm:$0xff]
      %v1321 = vld [vmem:[%s10 + $0x168] sm:$0xff]
      %v1322 = vld [vmem:[%s10 + $0x170] sm:$0xff]
      %v1323 = vld [vmem:[%s10 + $0x178] sm:$0xff]
      %v1324 = vld [vmem:[%s10 + $0x180] sm:$0xff]
      %v1325 = vld [vmem:[%s10 + $0x188] sm:$0xff]
      %v1326 = vld [vmem:[%s10 + $0x190] sm:$0xff]
      %v1327 = vld [vmem:[%s10 + $0x198] sm:$0xff]
      %v1328 = vld [vmem:[%s10 + $0x1a0] sm:$0xff]
      %v1329 = vld [vmem:[%s10 + $0x1a8] sm:$0xff]
      %v1330 = vld [vmem:[%s10 + $0x1b0] sm:$0xff]
      %v1331 = vld [vmem:[%s10 + $0x1b8] sm:$0xff]
      %v1332 = vld [vmem:[%s10 + $0x1c0] sm:$0xff]
      %v1333 = vld [vmem:[%s10 + $0x1c8] sm:$0xff]
      %v1334 = vld [vmem:[%s10 + $0x1d0] sm:$0xff]
      %v1335 = vld [vmem:[%s10 + $0x1d8] sm:$0xff]
      %v1336 = vld [vmem:[%s10 + $0x1e0] sm:$0xff]
      %v1337 = vld [vmem:[%s10 + $0x1e8] sm:$0xff]
      %v1338 = vld [vmem:[%s10 + $0x1f0] sm:$0xff]
      %v1339 = vld [vmem:[%s10 + $0x1f8] sm:$0xff]
      %v1340 = vld [vmem:[%s10 + $0x200] sm:$0xff]
      %v1341 = vld [vmem:[%s10 + $0x208] sm:$0xff]
      %v1342 = vld [vmem:[%s10 + $0x210] sm:$0xff]
      %v1343 = vld [vmem:[%s10 + $0x218] sm:$0xff]
      %v1344 = vld [vmem:[%s10 + $0x220] sm:$0xff]
      %v1345 = vld [vmem:[%s10 + $0x228] sm:$0xff]
      %v1346 = vld [vmem:[%s10 + $0x230] sm:$0xff]
      %v1347 = vld [vmem:[%s10 + $0x238] sm:$0xff]
      %v1348 = vld [vmem:[%s10 + $0x240] sm:$0xff]
      %v1349 = vld [vmem:[%s10 + $0x248] sm:$0xff]
      %v1350 = vld [vmem:[%s10 + $0x250] sm:$0xff]
      %v1351 = vld [vmem:[%s10 + $0x258] sm:$0xff]
      %v1352 = vld [vmem:[%s10 + $0x260] sm:$0xff]
      %v1353 = vld [vmem:[%s10 + $0x268] sm:$0xff]
      %v1354 = vld [vmem:[%s10 + $0x270] sm:$0xff]
      %v1355 = vld [vmem:[%s10 + $0x278] sm:$0xff]
      %v1356 = vld [vmem:[%s10 + $0x280] sm:$0xff]
      %v1357 = vld [vmem:[%s10 + $0x288] sm:$0xff]
      %v1358 = vld [vmem:[%s10 + $0x290] sm:$0xff]
      %v1359 = vld [vmem:[%s10 + $0x298] sm:$0xff]
      %v1360 = vld [vmem:[%s10 + $0x2a0] sm:$0xff]
      %v1361 = vld [vmem:[%s10 + $0x2a8] sm:$0xff]
      %v1362 = vld [vmem:[%s10 + $0x2b0] sm:$0xff]
      %v1363 = vld [vmem:[%s10 + $0x2b8] sm:$0xff]
      %v1364 = vld [vmem:[%s10 + $0x2c0] sm:$0xff]
      %v1365 = vld [vmem:[%s10 + $0x2c8] sm:$0xff]
      %v1366 = vld [vmem:[%s10 + $0x2d0] sm:$0xff]
      %v1367 = vld [vmem:[%s10 + $0x2d8] sm:$0xff]
      %v1368 = vld [vmem:[%s10 + $0x2e0] sm:$0xff]
      %v1369 = vld [vmem:[%s10 + $0x2e8] sm:$0xff]
      %v1370 = vld [vmem:[%s10 + $0x2f0] sm:$0xff]
      %v1371 = vld [vmem:[%s10 + $0x2f8] sm:$0xff]
      %v1372 = vld [vmem:[%s10 + $0x300] sm:$0xff]
      %v1373 = vld [vmem:[%s10 + $0x308] sm:$0xff]
      %v1374 = vld [vmem:[%s10 + $0x310] sm:$0xff]
      %v1375 = vld [vmem:[%s10 + $0x318] sm:$0xff]
      %v1376 = vld [vmem:[%s10 + $0x320] sm:$0xff]
      %v1377 = vld [vmem:[%s10 + $0x328] sm:$0xff]
      %v1378 = vld [vmem:[%s10 + $0x330] sm:$0xff]
      %v1379 = vld [vmem:[%s10 + $0x338] sm:$0xff]
      %v1380 = vld [vmem:[%s10 + $0x340] sm:$0xff]
      %v1381 = vld [vmem:[%s10 + $0x348] sm:$0xff]
      %v1382 = vld [vmem:[%s10 + $0x350] sm:$0xff]
      %v1383 = vld [vmem:[%s10 + $0x358] sm:$0xff]
      %v1384 = vld [vmem:[%s10 + $0x360] sm:$0xff]
      %v1385 = vld [vmem:[%s10 + $0x368] sm:$0xff]
      %v1386 = vld [vmem:[%s10 + $0x370] sm:$0xff]
      %v1387 = vld [vmem:[%s10 + $0x378] sm:$0xff]
      %v1388 = vld [vmem:[%s10 + $0x380] sm:$0xff]
      %v1389 = vld [vmem:[%s10 + $0x388] sm:$0xff]
      %v1390 = vld [vmem:[%s10 + $0x390] sm:$0xff]
      %v1391 = vld [vmem:[%s10 + $0x398] sm:$0xff]
      %v1392 = vld [vmem:[%s10 + $0x3a0] sm:$0xff]
      %v1393 = vld [vmem:[%s10 + $0x3a8] sm:$0xff]
      %v1394 = vld [vmem:[%s10 + $0x3b0] sm:$0xff]
      %v1395 = vld [vmem:[%s10 + $0x3b8] sm:$0xff]
      %v1396 = vld [vmem:[%s10 + $0x3c0] sm:$0xff]
      %v1397 = vld [vmem:[%s10 + $0x3c8] sm:$0xff]
      %v1398 = vld [vmem:[%s10 + $0x3d0] sm:$0xff]
      %v1399 = vld [vmem:[%s10 + $0x3d8] sm:$0xff]
      %v1400 = vld [vmem:[%s10 + $0x3e0] sm:$0xff]
      %v1401 = vld [vmem:[%s10 + $0x3e8] sm:$0xff]
      %v1402 = vld [vmem:[%s10 + $0x3f0] sm:$0xff]
      %v1403 = vld [vmem:[%s10 + $0x3f8] sm:$0xff]
      %1405 = vset.pattern.permute.xlu0 0
      %1406 = vperm.xlu0 %1405, %v1276
      %v1407 = vpop.permute.xlu0 %1406
      %1410 = vset.pattern.permute.xlu0 0
      %1411 = vperm.xlu0 %1410, %v1277
      %v1412 = vpop.permute.xlu0 %1411
      %1415 = vset.pattern.permute.xlu0 0
      %1416 = vperm.xlu0 %1415, %v1278
      %v1417 = vpop.permute.xlu0 %1416
      %1420 = vset.pattern.permute.xlu0 0
      %1421 = vperm.xlu0 %1420, %v1279
      %v1422 = vpop.permute.xlu0 %1421
      %1425 = vset.pattern.permute.xlu0 0
      %1426 = vperm.xlu0 %1425, %v1280
      %v1427 = vpop.permute.xlu0 %1426
      %1430 = vset.pattern.permute.xlu0 0
      %1431 = vperm.xlu0 %1430, %v1281
      %v1432 = vpop.permute.xlu0 %1431
      %1435 = vset.pattern.permute.xlu0 0
      %1436 = vperm.xlu0 %1435, %v1282
      %v1437 = vpop.permute.xlu0 %1436
      %1440 = vset.pattern.permute.xlu0 0
      %1441 = vperm.xlu0 %1440, %v1283
      %v1442 = vpop.permute.xlu0 %1441
      %1445 = vset.pattern.permute.xlu0 0
      %1446 = vperm.xlu0 %1445, %v1284
      %v1447 = vpop.permute.xlu0 %1446
      %1450 = vset.pattern.permute.xlu0 0
      %1451 = vperm.xlu0 %1450, %v1285
      %v1452 = vpop.permute.xlu0 %1451
      %1455 = vset.pattern.permute.xlu0 0
      %1456 = vperm.xlu0 %1455, %v1286
      %v1457 = vpop.permute.xlu0 %1456
      %1460 = vset.pattern.permute.xlu0 0
      %1461 = vperm.xlu0 %1460, %v1287
      %v1462 = vpop.permute.xlu0 %1461
      %1465 = vset.pattern.permute.xlu0 0
      %1466 = vperm.xlu0 %1465, %v1288
      %v1467 = vpop.permute.xlu0 %1466
      %1470 = vset.pattern.permute.xlu0 0
      %1471 = vperm.xlu0 %1470, %v1289
      %v1472 = vpop.permute.xlu0 %1471
      %1475 = vset.pattern.permute.xlu0 0
      %1476 = vperm.xlu0 %1475, %v1290
      %v1477 = vpop.permute.xlu0 %1476
      %1480 = vset.pattern.permute.xlu0 0
      %1481 = vperm.xlu0 %1480, %v1291
      %v1482 = vpop.permute.xlu0 %1481
      %1485 = vset.pattern.permute.xlu0 0
      %1486 = vperm.xlu0 %1485, %v1292
      %v1487 = vpop.permute.xlu0 %1486
      %1490 = vset.pattern.permute.xlu0 0
      %1491 = vperm.xlu0 %1490, %v1293
      %v1492 = vpop.permute.xlu0 %1491
      %1495 = vset.pattern.permute.xlu0 0
      %1496 = vperm.xlu0 %1495, %v1294
      %v1497 = vpop.permute.xlu0 %1496
      %1500 = vset.pattern.permute.xlu0 0
      %1501 = vperm.xlu0 %1500, %v1295
      %v1502 = vpop.permute.xlu0 %1501
      %1505 = vset.pattern.permute.xlu0 0
      %1506 = vperm.xlu0 %1505, %v1296
      %v1507 = vpop.permute.xlu0 %1506
      %1510 = vset.pattern.permute.xlu0 0
      %1511 = vperm.xlu0 %1510, %v1297
      %v1512 = vpop.permute.xlu0 %1511
      %1515 = vset.pattern.permute.xlu0 0
      %1516 = vperm.xlu0 %1515, %v1298
      %v1517 = vpop.permute.xlu0 %1516
      %1520 = vset.pattern.permute.xlu0 0
      %1521 = vperm.xlu0 %1520, %v1299
      %v1522 = vpop.permute.xlu0 %1521
      %1525 = vset.pattern.permute.xlu0 0
      %1526 = vperm.xlu0 %1525, %v1300
      %v1527 = vpop.permute.xlu0 %1526
      %1530 = vset.pattern.permute.xlu0 0
      %1531 = vperm.xlu0 %1530, %v1301
      %v1532 = vpop.permute.xlu0 %1531
      %1535 = vset.pattern.permute.xlu0 0
      %1536 = vperm.xlu0 %1535, %v1302
      %v1537 = vpop.permute.xlu0 %1536
      %1540 = vset.pattern.permute.xlu0 0
      %1541 = vperm.xlu0 %1540, %v1303
      %v1542 = vpop.permute.xlu0 %1541
      %1545 = vset.pattern.permute.xlu0 0
      %1546 = vperm.xlu0 %1545, %v1304
      %v1547 = vpop.permute.xlu0 %1546
      %1550 = vset.pattern.permute.xlu0 0
      %1551 = vperm.xlu0 %1550, %v1305
      %v1552 = vpop.permute.xlu0 %1551
      %1555 = vset.pattern.permute.xlu0 0
      %1556 = vperm.xlu0 %1555, %v1306
      %v1557 = vpop.permute.xlu0 %1556
      %1560 = vset.pattern.permute.xlu0 0
      %1561 = vperm.xlu0 %1560, %v1307
      %v1562 = vpop.permute.xlu0 %1561
      %1565 = vset.pattern.permute.xlu0 0
      %1566 = vperm.xlu0 %1565, %v1308
      %v1567 = vpop.permute.xlu0 %1566
      %1570 = vset.pattern.permute.xlu0 0
      %1571 = vperm.xlu0 %1570, %v1309
      %v1572 = vpop.permute.xlu0 %1571
      %1575 = vset.pattern.permute.xlu0 0
      %1576 = vperm.xlu0 %1575, %v1310
      %v1577 = vpop.permute.xlu0 %1576
      %1580 = vset.pattern.permute.xlu0 0
      %1581 = vperm.xlu0 %1580, %v1311
      %v1582 = vpop.permute.xlu0 %1581
      %1585 = vset.pattern.permute.xlu0 0
      %1586 = vperm.xlu0 %1585, %v1312
      %v1587 = vpop.permute.xlu0 %1586
      %1590 = vset.pattern.permute.xlu0 0
      %1591 = vperm.xlu0 %1590, %v1313
      %v1592 = vpop.permute.xlu0 %1591
      %1595 = vset.pattern.permute.xlu0 0
      %1596 = vperm.xlu0 %1595, %v1314
      %v1597 = vpop.permute.xlu0 %1596
      %1600 = vset.pattern.permute.xlu0 0
      %1601 = vperm.xlu0 %1600, %v1315
      %v1602 = vpop.permute.xlu0 %1601
      %1605 = vset.pattern.permute.xlu0 0
      %1606 = vperm.xlu0 %1605, %v1316
      %v1607 = vpop.permute.xlu0 %1606
      %1610 = vset.pattern.permute.xlu0 0
      %1611 = vperm.xlu0 %1610, %v1317
      %v1612 = vpop.permute.xlu0 %1611
      %1615 = vset.pattern.permute.xlu0 0
      %1616 = vperm.xlu0 %1615, %v1318
      %v1617 = vpop.permute.xlu0 %1616
      %1620 = vset.pattern.permute.xlu0 0
      %1621 = vperm.xlu0 %1620, %v1319
      %v1622 = vpop.permute.xlu0 %1621
      %1625 = vset.pattern.permute.xlu0 0
      %1626 = vperm.xlu0 %1625, %v1320
      %v1627 = vpop.permute.xlu0 %1626
      %1630 = vset.pattern.permute.xlu0 0
      %1631 = vperm.xlu0 %1630, %v1321
      %v1632 = vpop.permute.xlu0 %1631
      %1635 = vset.pattern.permute.xlu0 0
      %1636 = vperm.xlu0 %1635, %v1322
      %v1637 = vpop.permute.xlu0 %1636
      %1640 = vset.pattern.permute.xlu0 0
      %1641 = vperm.xlu0 %1640, %v1323
      %v1642 = vpop.permute.xlu0 %1641
      %1645 = vset.pattern.permute.xlu0 0
      %1646 = vperm.xlu0 %1645, %v1324
      %v1647 = vpop.permute.xlu0 %1646
      %1650 = vset.pattern.permute.xlu0 0
      %1651 = vperm.xlu0 %1650, %v1325
      %v1652 = vpop.permute.xlu0 %1651
      %1655 = vset.pattern.permute.xlu0 0
      %1656 = vperm.xlu0 %1655, %v1326
      %v1657 = vpop.permute.xlu0 %1656
      %1660 = vset.pattern.permute.xlu0 0
      %1661 = vperm.xlu0 %1660, %v1327
      %v1662 = vpop.permute.xlu0 %1661
      %1665 = vset.pattern.permute.xlu0 0
      %1666 = vperm.xlu0 %1665, %v1328
      %v1667 = vpop.permute.xlu0 %1666
      %1670 = vset.pattern.permute.xlu0 0
      %1671 = vperm.xlu0 %1670, %v1329
      %v1672 = vpop.permute.xlu0 %1671
      %1675 = vset.pattern.permute.xlu0 0
      %1676 = vperm.xlu0 %1675, %v1330
      %v1677 = vpop.permute.xlu0 %1676
      %1680 = vset.pattern.permute.xlu0 0
      %1681 = vperm.xlu0 %1680, %v1331
      %v1682 = vpop.permute.xlu0 %1681
      %1685 = vset.pattern.permute.xlu0 0
      %1686 = vperm.xlu0 %1685, %v1332
      %v1687 = vpop.permute.xlu0 %1686
      %1690 = vset.pattern.permute.xlu0 0
      %1691 = vperm.xlu0 %1690, %v1333
      %v1692 = vpop.permute.xlu0 %1691
      %1695 = vset.pattern.permute.xlu0 0
      %1696 = vperm.xlu0 %1695, %v1334
      %v1697 = vpop.permute.xlu0 %1696
      %1700 = vset.pattern.permute.xlu0 0
      %1701 = vperm.xlu0 %1700, %v1335
      %v1702 = vpop.permute.xlu0 %1701
      %1705 = vset.pattern.permute.xlu0 0
      %1706 = vperm.xlu0 %1705, %v1336
      %v1707 = vpop.permute.xlu0 %1706
      %1710 = vset.pattern.permute.xlu0 0
      %1711 = vperm.xlu0 %1710, %v1337
      %v1712 = vpop.permute.xlu0 %1711
      %1715 = vset.pattern.permute.xlu0 0
      %1716 = vperm.xlu0 %1715, %v1338
      %v1717 = vpop.permute.xlu0 %1716
      %1720 = vset.pattern.permute.xlu0 0
      %1721 = vperm.xlu0 %1720, %v1339
      %v1722 = vpop.permute.xlu0 %1721
      %1725 = vset.pattern.permute.xlu0 0
      %1726 = vperm.xlu0 %1725, %v1340
      %v1727 = vpop.permute.xlu0 %1726
      %1730 = vset.pattern.permute.xlu0 0
      %1731 = vperm.xlu0 %1730, %v1341
      %v1732 = vpop.permute.xlu0 %1731
      %1735 = vset.pattern.permute.xlu0 0
      %1736 = vperm.xlu0 %1735, %v1342
      %v1737 = vpop.permute.xlu0 %1736
      %1740 = vset.pattern.permute.xlu0 0
      %1741 = vperm.xlu0 %1740, %v1343
      %v1742 = vpop.permute.xlu0 %1741
      %1745 = vset.pattern.permute.xlu0 0
      %1746 = vperm.xlu0 %1745, %v1344
      %v1747 = vpop.permute.xlu0 %1746
      %1750 = vset.pattern.permute.xlu0 0
      %1751 = vperm.xlu0 %1750, %v1345
      %v1752 = vpop.permute.xlu0 %1751
      %1755 = vset.pattern.permute.xlu0 0
      %1756 = vperm.xlu0 %1755, %v1346
      %v1757 = vpop.permute.xlu0 %1756
      %1760 = vset.pattern.permute.xlu0 0
      %1761 = vperm.xlu0 %1760, %v1347
      %v1762 = vpop.permute.xlu0 %1761
      %1765 = vset.pattern.permute.xlu0 0
      %1766 = vperm.xlu0 %1765, %v1348
      %v1767 = vpop.permute.xlu0 %1766
      %1770 = vset.pattern.permute.xlu0 0
      %1771 = vperm.xlu0 %1770, %v1349
      %v1772 = vpop.permute.xlu0 %1771
      %1775 = vset.pattern.permute.xlu0 0
      %1776 = vperm.xlu0 %1775, %v1350
      %v1777 = vpop.permute.xlu0 %1776
      %1780 = vset.pattern.permute.xlu0 0
      %1781 = vperm.xlu0 %1780, %v1351
      %v1782 = vpop.permute.xlu0 %1781
      %1785 = vset.pattern.permute.xlu0 0
      %1786 = vperm.xlu0 %1785, %v1352
      %v1787 = vpop.permute.xlu0 %1786
      %1790 = vset.pattern.permute.xlu0 0
      %1791 = vperm.xlu0 %1790, %v1353
      %v1792 = vpop.permute.xlu0 %1791
      %1795 = vset.pattern.permute.xlu0 0
      %1796 = vperm.xlu0 %1795, %v1354
      %v1797 = vpop.permute.xlu0 %1796
      %1800 = vset.pattern.permute.xlu0 0
      %1801 = vperm.xlu0 %1800, %v1355
      %v1802 = vpop.permute.xlu0 %1801
      %1805 = vset.pattern.permute.xlu0 0
      %1806 = vperm.xlu0 %1805, %v1356
      %v1807 = vpop.permute.xlu0 %1806
      %1810 = vset.pattern.permute.xlu0 0
      %1811 = vperm.xlu0 %1810, %v1357
      %v1812 = vpop.permute.xlu0 %1811
      %1815 = vset.pattern.permute.xlu0 0
      %1816 = vperm.xlu0 %1815, %v1358
      %v1817 = vpop.permute.xlu0 %1816
      %1820 = vset.pattern.permute.xlu0 0
      %1821 = vperm.xlu0 %1820, %v1359
      %v1822 = vpop.permute.xlu0 %1821
      %1825 = vset.pattern.permute.xlu0 0
      %1826 = vperm.xlu0 %1825, %v1360
      %v1827 = vpop.permute.xlu0 %1826
      %1830 = vset.pattern.permute.xlu0 0
      %1831 = vperm.xlu0 %1830, %v1361
      %v1832 = vpop.permute.xlu0 %1831
      %1835 = vset.pattern.permute.xlu0 0
      %1836 = vperm.xlu0 %1835, %v1362
      %v1837 = vpop.permute.xlu0 %1836
      %1840 = vset.pattern.permute.xlu0 0
      %1841 = vperm.xlu0 %1840, %v1363
      %v1842 = vpop.permute.xlu0 %1841
      %1845 = vset.pattern.permute.xlu0 0
      %1846 = vperm.xlu0 %1845, %v1364
      %v1847 = vpop.permute.xlu0 %1846
      %1850 = vset.pattern.permute.xlu0 0
      %1851 = vperm.xlu0 %1850, %v1365
      %v1852 = vpop.permute.xlu0 %1851
      %1855 = vset.pattern.permute.xlu0 0
      %1856 = vperm.xlu0 %1855, %v1366
      %v1857 = vpop.permute.xlu0 %1856
      %1860 = vset.pattern.permute.xlu0 0
      %1861 = vperm.xlu0 %1860, %v1367
      %v1862 = vpop.permute.xlu0 %1861
      %1865 = vset.pattern.permute.xlu0 0
      %1866 = vperm.xlu0 %1865, %v1368
      %v1867 = vpop.permute.xlu0 %1866
      %1870 = vset.pattern.permute.xlu0 0
      %1871 = vperm.xlu0 %1870, %v1369
      %v1872 = vpop.permute.xlu0 %1871
      %1875 = vset.pattern.permute.xlu0 0
      %1876 = vperm.xlu0 %1875, %v1370
      %v1877 = vpop.permute.xlu0 %1876
      %1880 = vset.pattern.permute.xlu0 0
      %1881 = vperm.xlu0 %1880, %v1371
      %v1882 = vpop.permute.xlu0 %1881
      %1885 = vset.pattern.permute.xlu0 0
      %1886 = vperm.xlu0 %1885, %v1372
      %v1887 = vpop.permute.xlu0 %1886
      %1890 = vset.pattern.permute.xlu0 0
      %1891 = vperm.xlu0 %1890, %v1373
      %v1892 = vpop.permute.xlu0 %1891
      %1895 = vset.pattern.permute.xlu0 0
      %1896 = vperm.xlu0 %1895, %v1374
      %v1897 = vpop.permute.xlu0 %1896
      %1900 = vset.pattern.permute.xlu0 0
      %1901 = vperm.xlu0 %1900, %v1375
      %v1902 = vpop.permute.xlu0 %1901
      %1905 = vset.pattern.permute.xlu0 0
      %1906 = vperm.xlu0 %1905, %v1376
      %v1907 = vpop.permute.xlu0 %1906
      %1910 = vset.pattern.permute.xlu0 0
      %1911 = vperm.xlu0 %1910, %v1377
      %v1912 = vpop.permute.xlu0 %1911
      %1915 = vset.pattern.permute.xlu0 0
      %1916 = vperm.xlu0 %1915, %v1378
      %v1917 = vpop.permute.xlu0 %1916
      %1920 = vset.pattern.permute.xlu0 0
      %1921 = vperm.xlu0 %1920, %v1379
      %v1922 = vpop.permute.xlu0 %1921
      %1925 = vset.pattern.permute.xlu0 0
      %1926 = vperm.xlu0 %1925, %v1380
      %v1927 = vpop.permute.xlu0 %1926
      %1930 = vset.pattern.permute.xlu0 0
      %1931 = vperm.xlu0 %1930, %v1381
      %v1932 = vpop.permute.xlu0 %1931
      %1935 = vset.pattern.permute.xlu0 0
      %1936 = vperm.xlu0 %1935, %v1382
      %v1937 = vpop.permute.xlu0 %1936
      %1940 = vset.pattern.permute.xlu0 0
      %1941 = vperm.xlu0 %1940, %v1383
      %v1942 = vpop.permute.xlu0 %1941
      %1945 = vset.pattern.permute.xlu0 0
      %1946 = vperm.xlu0 %1945, %v1384
      %v1947 = vpop.permute.xlu0 %1946
      %1950 = vset.pattern.permute.xlu0 0
      %1951 = vperm.xlu0 %1950, %v1385
      %v1952 = vpop.permute.xlu0 %1951
      %1955 = vset.pattern.permute.xlu0 0
      %1956 = vperm.xlu0 %1955, %v1386
      %v1957 = vpop.permute.xlu0 %1956
      %1960 = vset.pattern.permute.xlu0 0
      %1961 = vperm.xlu0 %1960, %v1387
      %v1962 = vpop.permute.xlu0 %1961
      %1965 = vset.pattern.permute.xlu0 0
      %1966 = vperm.xlu0 %1965, %v1388
      %v1967 = vpop.permute.xlu0 %1966
      %1970 = vset.pattern.permute.xlu0 0
      %1971 = vperm.xlu0 %1970, %v1389
      %v1972 = vpop.permute.xlu0 %1971
      %1975 = vset.pattern.permute.xlu0 0
      %1976 = vperm.xlu0 %1975, %v1390
      %v1977 = vpop.permute.xlu0 %1976
      %1980 = vset.pattern.permute.xlu0 0
      %1981 = vperm.xlu0 %1980, %v1391
      %v1982 = vpop.permute.xlu0 %1981
      %1985 = vset.pattern.permute.xlu0 0
      %1986 = vperm.xlu0 %1985, %v1392
      %v1987 = vpop.permute.xlu0 %1986
      %1990 = vset.pattern.permute.xlu0 0
      %1991 = vperm.xlu0 %1990, %v1393
      %v1992 = vpop.permute.xlu0 %1991
      %1995 = vset.pattern.permute.xlu0 0
      %1996 = vperm.xlu0 %1995, %v1394
      %v1997 = vpop.permute.xlu0 %1996
      %2000 = vset.pattern.permute.xlu0 0
      %2001 = vperm.xlu0 %2000, %v1395
      %v2002 = vpop.permute.xlu0 %2001
      %2005 = vset.pattern.permute.xlu0 0
      %2006 = vperm.xlu0 %2005, %v1396
      %v2007 = vpop.permute.xlu0 %2006
      %2010 = vset.pattern.permute.xlu0 0
      %2011 = vperm.xlu0 %2010, %v1397
      %v2012 = vpop.permute.xlu0 %2011
      %2015 = vset.pattern.permute.xlu0 0
      %2016 = vperm.xlu0 %2015, %v1398
      %v2017 = vpop.permute.xlu0 %2016
      %2020 = vset.pattern.permute.xlu0 0
      %2021 = vperm.xlu0 %2020, %v1399
      %v2022 = vpop.permute.xlu0 %2021
      %2025 = vset.pattern.permute.xlu0 0
      %2026 = vperm.xlu0 %2025, %v1400
      %v2027 = vpop.permute.xlu0 %2026
      %2030 = vset.pattern.permute.xlu0 0
      %2031 = vperm.xlu0 %2030, %v1401
      %v2032 = vpop.permute.xlu0 %2031
      %2035 = vset.pattern.permute.xlu0 0
      %2036 = vperm.xlu0 %2035, %v1402
      %v2037 = vpop.permute.xlu0 %2036
      %2040 = vset.pattern.permute.xlu0 0
      %2041 = vperm.xlu0 %2040, %v1403
      %v2042 = vpop.permute.xlu0 %2041
      %v2172 = vunpack.c.l.b16 %v1148
      %v2173 = vunpack.c.l.b16 %v1149
      %v2174 = vunpack.c.l.b16 %v1150
      %v2175 = vunpack.c.l.b16 %v1151
      %v2176 = vunpack.c.l.b16 %v1152
      %v2177 = vunpack.c.l.b16 %v1153
      %v2178 = vunpack.c.l.b16 %v1154
      %v2179 = vunpack.c.l.b16 %v1155
      %v2180 = vunpack.c.l.b16 %v1156
      %v2181 = vunpack.c.l.b16 %v1157
      %v2182 = vunpack.c.l.b16 %v1158
      %v2183 = vunpack.c.l.b16 %v1159
      %v2184 = vunpack.c.l.b16 %v1160
      %v2185 = vunpack.c.l.b16 %v1161
      %v2186 = vunpack.c.l.b16 %v1162
      %v2187 = vunpack.c.l.b16 %v1163
      %v2188 = vunpack.c.l.b16 %v1164
      %v2189 = vunpack.c.l.b16 %v1165
      %v2190 = vunpack.c.l.b16 %v1166
      %v2191 = vunpack.c.l.b16 %v1167
      %v2192 = vunpack.c.l.b16 %v1168
      %v2193 = vunpack.c.l.b16 %v1169
      %v2194 = vunpack.c.l.b16 %v1170
      %v2195 = vunpack.c.l.b16 %v1171
      %v2196 = vunpack.c.l.b16 %v1172
      %v2197 = vunpack.c.l.b16 %v1173
      %v2198 = vunpack.c.l.b16 %v1174
      %v2199 = vunpack.c.l.b16 %v1175
      %v2200 = vunpack.c.l.b16 %v1176
      %v2201 = vunpack.c.l.b16 %v1177
      %v2202 = vunpack.c.l.b16 %v1178
      %v2203 = vunpack.c.l.b16 %v1179
      %v2204 = vunpack.c.l.b16 %v1180
      %v2205 = vunpack.c.l.b16 %v1181
      %v2206 = vunpack.c.l.b16 %v1182
      %v2207 = vunpack.c.l.b16 %v1183
      %v2208 = vunpack.c.l.b16 %v1184
      %v2209 = vunpack.c.l.b16 %v1185
      %v2210 = vunpack.c.l.b16 %v1186
      %v2211 = vunpack.c.l.b16 %v1187
      %v2212 = vunpack.c.l.b16 %v1188
      %v2213 = vunpack.c.l.b16 %v1189
      %v2214 = vunpack.c.l.b16 %v1190
      %v2215 = vunpack.c.l.b16 %v1191
      %v2216 = vunpack.c.l.b16 %v1192
      %v2217 = vunpack.c.l.b16 %v1193
      %v2218 = vunpack.c.l.b16 %v1194
      %v2219 = vunpack.c.l.b16 %v1195
      %v2220 = vunpack.c.l.b16 %v1196
      %v2221 = vunpack.c.l.b16 %v1197
      %v2222 = vunpack.c.l.b16 %v1198
      %v2223 = vunpack.c.l.b16 %v1199
      %v2224 = vunpack.c.l.b16 %v1200
      %v2225 = vunpack.c.l.b16 %v1201
      %v2226 = vunpack.c.l.b16 %v1202
      %v2227 = vunpack.c.l.b16 %v1203
      %v2228 = vunpack.c.l.b16 %v1204
      %v2229 = vunpack.c.l.b16 %v1205
      %v2230 = vunpack.c.l.b16 %v1206
      %v2231 = vunpack.c.l.b16 %v1207
      %v2232 = vunpack.c.l.b16 %v1208
      %v2233 = vunpack.c.l.b16 %v1209
      %v2234 = vunpack.c.l.b16 %v1210
      %v2235 = vunpack.c.l.b16 %v1211
      %v2236 = vunpack.c.l.b16 %v1212
      %v2237 = vunpack.c.l.b16 %v1213
      %v2238 = vunpack.c.l.b16 %v1214
      %v2239 = vunpack.c.l.b16 %v1215
      %v2240 = vunpack.c.l.b16 %v1216
      %v2241 = vunpack.c.l.b16 %v1217
      %v2242 = vunpack.c.l.b16 %v1218
      %v2243 = vunpack.c.l.b16 %v1219
      %v2244 = vunpack.c.l.b16 %v1220
      %v2245 = vunpack.c.l.b16 %v1221
      %v2246 = vunpack.c.l.b16 %v1222
      %v2247 = vunpack.c.l.b16 %v1223
      %v2248 = vunpack.c.l.b16 %v1224
      %v2249 = vunpack.c.l.b16 %v1225
      %v2250 = vunpack.c.l.b16 %v1226
      %v2251 = vunpack.c.l.b16 %v1227
      %v2252 = vunpack.c.l.b16 %v1228
      %v2253 = vunpack.c.l.b16 %v1229
      %v2254 = vunpack.c.l.b16 %v1230
      %v2255 = vunpack.c.l.b16 %v1231
      %v2256 = vunpack.c.l.b16 %v1232
      %v2257 = vunpack.c.l.b16 %v1233
      %v2258 = vunpack.c.l.b16 %v1234
      %v2259 = vunpack.c.l.b16 %v1235
      %v2260 = vunpack.c.l.b16 %v1236
      %v2261 = vunpack.c.l.b16 %v1237
      %v2262 = vunpack.c.l.b16 %v1238
      %v2263 = vunpack.c.l.b16 %v1239
      %v2264 = vunpack.c.l.b16 %v1240
      %v2265 = vunpack.c.l.b16 %v1241
      %v2266 = vunpack.c.l.b16 %v1242
      %v2267 = vunpack.c.l.b16 %v1243
      %v2268 = vunpack.c.l.b16 %v1244
      %v2269 = vunpack.c.l.b16 %v1245
      %v2270 = vunpack.c.l.b16 %v1246
      %v2271 = vunpack.c.l.b16 %v1247
      %v2272 = vunpack.c.l.b16 %v1248
      %v2273 = vunpack.c.l.b16 %v1249
      %v2274 = vunpack.c.l.b16 %v1250
      %v2275 = vunpack.c.l.b16 %v1251
      %v2276 = vunpack.c.l.b16 %v1252
      %v2277 = vunpack.c.l.b16 %v1253
      %v2278 = vunpack.c.l.b16 %v1254
      %v2279 = vunpack.c.l.b16 %v1255
      %v2280 = vunpack.c.l.b16 %v1256
      %v2281 = vunpack.c.l.b16 %v1257
      %v2282 = vunpack.c.l.b16 %v1258
      %v2283 = vunpack.c.l.b16 %v1259
      %v2284 = vunpack.c.l.b16 %v1260
      %v2285 = vunpack.c.l.b16 %v1261
      %v2286 = vunpack.c.l.b16 %v1262
      %v2287 = vunpack.c.l.b16 %v1263
      %v2288 = vunpack.c.l.b16 %v1264
      %v2289 = vunpack.c.l.b16 %v1265
      %v2290 = vunpack.c.l.b16 %v1266
      %v2291 = vunpack.c.l.b16 %v1267
      %v2292 = vunpack.c.l.b16 %v1268
      %v2293 = vunpack.c.l.b16 %v1269
      %v2294 = vunpack.c.l.b16 %v1270
      %v2295 = vunpack.c.l.b16 %v1271
      %v2296 = vunpack.c.l.b16 %v1272
      %v2297 = vunpack.c.l.b16 %v1273
      %v2298 = vunpack.c.l.b16 %v1274
      %v2299 = vunpack.c.l.b16 %v1275
      %v2300 = vpack.c.b16 %v2173, %v2172
      %v2301 = vpack.c.b16 %v2175, %v2174
      %v2302 = vpack.c.b16 %v2177, %v2176
      %v2303 = vpack.c.b16 %v2179, %v2178
      %v2304 = vpack.c.b16 %v2181, %v2180
      %v2305 = vpack.c.b16 %v2183, %v2182
      %v2306 = vpack.c.b16 %v2185, %v2184
      %v2307 = vpack.c.b16 %v2187, %v2186
      %v2308 = vpack.c.b16 %v2189, %v2188
      %v2309 = vpack.c.b16 %v2191, %v2190
      %v2310 = vpack.c.b16 %v2193, %v2192
      %v2311 = vpack.c.b16 %v2195, %v2194
      %v2312 = vpack.c.b16 %v2197, %v2196
      %v2313 = vpack.c.b16 %v2199, %v2198
      %v2314 = vpack.c.b16 %v2201, %v2200
      %v2315 = vpack.c.b16 %v2203, %v2202
      %v2316 = vpack.c.b16 %v2205, %v2204
      %v2317 = vpack.c.b16 %v2207, %v2206
      %v2318 = vpack.c.b16 %v2209, %v2208
      %v2319 = vpack.c.b16 %v2211, %v2210
      %v2320 = vpack.c.b16 %v2213, %v2212
      %v2321 = vpack.c.b16 %v2215, %v2214
      %v2322 = vpack.c.b16 %v2217, %v2216
      %v2323 = vpack.c.b16 %v2219, %v2218
      %v2324 = vpack.c.b16 %v2221, %v2220
      %v2325 = vpack.c.b16 %v2223, %v2222
      %v2326 = vpack.c.b16 %v2225, %v2224
      %v2327 = vpack.c.b16 %v2227, %v2226
      %v2328 = vpack.c.b16 %v2229, %v2228
      %v2329 = vpack.c.b16 %v2231, %v2230
      %v2330 = vpack.c.b16 %v2233, %v2232
      %v2331 = vpack.c.b16 %v2235, %v2234
      %v2332 = vpack.c.b16 %v2237, %v2236
      %v2333 = vpack.c.b16 %v2239, %v2238
      %v2334 = vpack.c.b16 %v2241, %v2240
      %v2335 = vpack.c.b16 %v2243, %v2242
      %v2336 = vpack.c.b16 %v2245, %v2244
      %v2337 = vpack.c.b16 %v2247, %v2246
      %v2338 = vpack.c.b16 %v2249, %v2248
      %v2339 = vpack.c.b16 %v2251, %v2250
      %v2340 = vpack.c.b16 %v2253, %v2252
      %v2341 = vpack.c.b16 %v2255, %v2254
      %v2342 = vpack.c.b16 %v2257, %v2256
      %v2343 = vpack.c.b16 %v2259, %v2258
      %v2344 = vpack.c.b16 %v2261, %v2260
      %v2345 = vpack.c.b16 %v2263, %v2262
      %v2346 = vpack.c.b16 %v2265, %v2264
      %v2347 = vpack.c.b16 %v2267, %v2266
      %v2348 = vpack.c.b16 %v2269, %v2268
      %v2349 = vpack.c.b16 %v2271, %v2270
      %v2350 = vpack.c.b16 %v2273, %v2272
      %v2351 = vpack.c.b16 %v2275, %v2274
      %v2352 = vpack.c.b16 %v2277, %v2276
      %v2353 = vpack.c.b16 %v2279, %v2278
      %v2354 = vpack.c.b16 %v2281, %v2280
      %v2355 = vpack.c.b16 %v2283, %v2282
      %v2356 = vpack.c.b16 %v2285, %v2284
      %v2357 = vpack.c.b16 %v2287, %v2286
      %v2358 = vpack.c.b16 %v2289, %v2288
      %v2359 = vpack.c.b16 %v2291, %v2290
      %v2360 = vpack.c.b16 %v2293, %v2292
      %v2361 = vpack.c.b16 %v2295, %v2294
      %v2362 = vpack.c.b16 %v2297, %v2296
      %v2363 = vpack.c.b16 %v2299, %v2298
      %2428 = vmatpush.bf16.msra.mxu0 %v1147
      %2429 = vmatpush.bf16.msra.mxu0 %v1146
      %2430 = vmatpush.bf16.msra.mxu0 %v1145
      %2431 = vmatpush.bf16.msra.mxu0 %v1144
      %2432 = vmatpush.bf16.msra.mxu0 %v1143
      %2433 = vmatpush.bf16.msra.mxu0 %v1142
      %2434 = vmatpush.bf16.msra.mxu0 %v1141
      %2435 = vmatpush.bf16.msra.mxu0 %v1140
      %2436 = vmatmul.bf16.gmra.mxu0 %v2300
      %v2437 = vpop.f32.mrf.mxu0
      %v2438 = vadd.f32 %v1407, %v2437
      %v2439 = vpop.f32.mrf.mxu0
      %v2440 = vadd.f32 %v1412, %v2439
      %2441 = vmatmul.bf16.gmra.mxu0 %v2301
      %v2442 = vpop.f32.mrf.mxu0
      %v2443 = vadd.f32 %v1417, %v2442
      %v2444 = vpop.f32.mrf.mxu0
      %v2445 = vadd.f32 %v1422, %v2444
      %2446 = vmatmul.bf16.gmra.mxu0 %v2302
      %v2447 = vpop.f32.mrf.mxu0
      %v2448 = vadd.f32 %v1427, %v2447
      %v2449 = vpop.f32.mrf.mxu0
      %v2450 = vadd.f32 %v1432, %v2449
      %2451 = vmatmul.bf16.gmra.mxu0 %v2303
      %v2452 = vpop.f32.mrf.mxu0
      %v2453 = vadd.f32 %v1437, %v2452
      %v2454 = vpop.f32.mrf.mxu0
      %v2455 = vadd.f32 %v1442, %v2454
      %2456 = vmatmul.bf16.gmra.mxu0 %v2304
      %v2457 = vpop.f32.mrf.mxu0
      %v2458 = vadd.f32 %v1447, %v2457
      %v2459 = vpop.f32.mrf.mxu0
      %v2460 = vadd.f32 %v1452, %v2459
      %2461 = vmatmul.bf16.gmra.mxu0 %v2305
      %v2462 = vpop.f32.mrf.mxu0
      %v2463 = vadd.f32 %v1457, %v2462
      %v2464 = vpop.f32.mrf.mxu0
      %v2465 = vadd.f32 %v1462, %v2464
      %2466 = vmatmul.bf16.gmra.mxu0 %v2306
      %v2467 = vpop.f32.mrf.mxu0
      %v2468 = vadd.f32 %v1467, %v2467
      %v2469 = vpop.f32.mrf.mxu0
      %v2470 = vadd.f32 %v1472, %v2469
      %2471 = vmatmul.bf16.gmra.mxu0 %v2307
      %v2472 = vpop.f32.mrf.mxu0
      %v2473 = vadd.f32 %v1477, %v2472
      %v2474 = vpop.f32.mrf.mxu0
      %v2475 = vadd.f32 %v1482, %v2474
      %2476 = vmatmul.bf16.gmra.mxu0 %v2308
      %v2477 = vpop.f32.mrf.mxu0
      %v2478 = vadd.f32 %v1487, %v2477
      %v2479 = vpop.f32.mrf.mxu0
      %v2480 = vadd.f32 %v1492, %v2479
      %2481 = vmatmul.bf16.gmra.mxu0 %v2309
      %v2482 = vpop.f32.mrf.mxu0
      %v2483 = vadd.f32 %v1497, %v2482
      %v2484 = vpop.f32.mrf.mxu0
      %v2485 = vadd.f32 %v1502, %v2484
      %2486 = vmatmul.bf16.gmra.mxu0 %v2310
      %v2487 = vpop.f32.mrf.mxu0
      %v2488 = vadd.f32 %v1507, %v2487
      %v2489 = vpop.f32.mrf.mxu0
      %v2490 = vadd.f32 %v1512, %v2489
      %2491 = vmatmul.bf16.gmra.mxu0 %v2311
      %v2492 = vpop.f32.mrf.mxu0
      %v2493 = vadd.f32 %v1517, %v2492
      %v2494 = vpop.f32.mrf.mxu0
      %v2495 = vadd.f32 %v1522, %v2494
      %2496 = vmatmul.bf16.gmra.mxu0 %v2312
      %v2497 = vpop.f32.mrf.mxu0
      %v2498 = vadd.f32 %v1527, %v2497
      %v2499 = vpop.f32.mrf.mxu0
      %v2500 = vadd.f32 %v1532, %v2499
      %2501 = vmatmul.bf16.gmra.mxu0 %v2313
      %v2502 = vpop.f32.mrf.mxu0
      %v2503 = vadd.f32 %v1537, %v2502
      %v2504 = vpop.f32.mrf.mxu0
      %v2505 = vadd.f32 %v1542, %v2504
      %2506 = vmatmul.bf16.gmra.mxu0 %v2314
      %v2507 = vpop.f32.mrf.mxu0
      %v2508 = vadd.f32 %v1547, %v2507
      %v2509 = vpop.f32.mrf.mxu0
      %v2510 = vadd.f32 %v1552, %v2509
      %2511 = vmatmul.bf16.gmra.mxu0 %v2315
      %v2512 = vpop.f32.mrf.mxu0
      %v2513 = vadd.f32 %v1557, %v2512
      %v2514 = vpop.f32.mrf.mxu0
      %v2515 = vadd.f32 %v1562, %v2514
      %2516 = vmatmul.bf16.gmra.mxu0 %v2316
      %v2517 = vpop.f32.mrf.mxu0
      %v2518 = vadd.f32 %v1567, %v2517
      %v2519 = vpop.f32.mrf.mxu0
      %v2520 = vadd.f32 %v1572, %v2519
      %2521 = vmatmul.bf16.gmra.mxu0 %v2317
      %v2522 = vpop.f32.mrf.mxu0
      %v2523 = vadd.f32 %v1577, %v2522
      %v2524 = vpop.f32.mrf.mxu0
      %v2525 = vadd.f32 %v1582, %v2524
      %2526 = vmatmul.bf16.gmra.mxu0 %v2318
      %v2527 = vpop.f32.mrf.mxu0
      %v2528 = vadd.f32 %v1587, %v2527
      %v2529 = vpop.f32.mrf.mxu0
      %v2530 = vadd.f32 %v1592, %v2529
      %2531 = vmatmul.bf16.gmra.mxu0 %v2319
      %v2532 = vpop.f32.mrf.mxu0
      %v2533 = vadd.f32 %v1597, %v2532
      %v2534 = vpop.f32.mrf.mxu0
      %v2535 = vadd.f32 %v1602, %v2534
      %2536 = vmatmul.bf16.gmra.mxu0 %v2320
      %v2537 = vpop.f32.mrf.mxu0
      %v2538 = vadd.f32 %v1607, %v2537
      %v2539 = vpop.f32.mrf.mxu0
      %v2540 = vadd.f32 %v1612, %v2539
      %2541 = vmatmul.bf16.gmra.mxu0 %v2321
      %v2542 = vpop.f32.mrf.mxu0
      %v2543 = vadd.f32 %v1617, %v2542
      %v2544 = vpop.f32.mrf.mxu0
      %v2545 = vadd.f32 %v1622, %v2544
      %2546 = vmatmul.bf16.gmra.mxu0 %v2322
      %v2547 = vpop.f32.mrf.mxu0
      %v2548 = vadd.f32 %v1627, %v2547
      %v2549 = vpop.f32.mrf.mxu0
      %v2550 = vadd.f32 %v1632, %v2549
      %2551 = vmatmul.bf16.gmra.mxu0 %v2323
      %v2552 = vpop.f32.mrf.mxu0
      %v2553 = vadd.f32 %v1637, %v2552
      %v2554 = vpop.f32.mrf.mxu0
      %v2555 = vadd.f32 %v1642, %v2554
      %2556 = vmatmul.bf16.gmra.mxu0 %v2324
      %v2557 = vpop.f32.mrf.mxu0
      %v2558 = vadd.f32 %v1647, %v2557
      %v2559 = vpop.f32.mrf.mxu0
      %v2560 = vadd.f32 %v1652, %v2559
      %2561 = vmatmul.bf16.gmra.mxu0 %v2325
      %v2562 = vpop.f32.mrf.mxu0
      %v2563 = vadd.f32 %v1657, %v2562
      %v2564 = vpop.f32.mrf.mxu0
      %v2565 = vadd.f32 %v1662, %v2564
      %2566 = vmatmul.bf16.gmra.mxu0 %v2326
      %v2567 = vpop.f32.mrf.mxu0
      %v2568 = vadd.f32 %v1667, %v2567
      %v2569 = vpop.f32.mrf.mxu0
      %v2570 = vadd.f32 %v1672, %v2569
      %2571 = vmatmul.bf16.gmra.mxu0 %v2327
      %v2572 = vpop.f32.mrf.mxu0
      %v2573 = vadd.f32 %v1677, %v2572
      %v2574 = vpop.f32.mrf.mxu0
      %v2575 = vadd.f32 %v1682, %v2574
      %2576 = vmatmul.bf16.gmra.mxu0 %v2328
      %v2577 = vpop.f32.mrf.mxu0
      %v2578 = vadd.f32 %v1687, %v2577
      %v2579 = vpop.f32.mrf.mxu0
      %v2580 = vadd.f32 %v1692, %v2579
      %2581 = vmatmul.bf16.gmra.mxu0 %v2329
      %v2582 = vpop.f32.mrf.mxu0
      %v2583 = vadd.f32 %v1697, %v2582
      %v2584 = vpop.f32.mrf.mxu0
      %v2585 = vadd.f32 %v1702, %v2584
      %2586 = vmatmul.bf16.gmra.mxu0 %v2330
      %v2587 = vpop.f32.mrf.mxu0
      %v2588 = vadd.f32 %v1707, %v2587
      %v2589 = vpop.f32.mrf.mxu0
      %v2590 = vadd.f32 %v1712, %v2589
      %2591 = vmatmul.bf16.gmra.mxu0 %v2331
      %v2592 = vpop.f32.mrf.mxu0
      %v2593 = vadd.f32 %v1717, %v2592
      %v2594 = vpop.f32.mrf.mxu0
      %v2595 = vadd.f32 %v1722, %v2594
      %2596 = vmatmul.bf16.gmra.mxu0 %v2332
      %v2597 = vpop.f32.mrf.mxu0
      %v2598 = vadd.f32 %v1727, %v2597
      %v2599 = vpop.f32.mrf.mxu0
      %v2600 = vadd.f32 %v1732, %v2599
      %2601 = vmatmul.bf16.gmra.mxu0 %v2333
      %v2602 = vpop.f32.mrf.mxu0
      %v2603 = vadd.f32 %v1737, %v2602
      %v2604 = vpop.f32.mrf.mxu0
      %v2605 = vadd.f32 %v1742, %v2604
      %2606 = vmatmul.bf16.gmra.mxu0 %v2334
      %v2607 = vpop.f32.mrf.mxu0
      %v2608 = vadd.f32 %v1747, %v2607
      %v2609 = vpop.f32.mrf.mxu0
      %v2610 = vadd.f32 %v1752, %v2609
      %2611 = vmatmul.bf16.gmra.mxu0 %v2335
      %v2612 = vpop.f32.mrf.mxu0
      %v2613 = vadd.f32 %v1757, %v2612
      %v2614 = vpop.f32.mrf.mxu0
      %v2615 = vadd.f32 %v1762, %v2614
      %2616 = vmatmul.bf16.gmra.mxu0 %v2336
      %v2617 = vpop.f32.mrf.mxu0
      %v2618 = vadd.f32 %v1767, %v2617
      %v2619 = vpop.f32.mrf.mxu0
      %v2620 = vadd.f32 %v1772, %v2619
      %2621 = vmatmul.bf16.gmra.mxu0 %v2337
      %v2622 = vpop.f32.mrf.mxu0
      %v2623 = vadd.f32 %v1777, %v2622
      %v2624 = vpop.f32.mrf.mxu0
      %v2625 = vadd.f32 %v1782, %v2624
      %2626 = vmatmul.bf16.gmra.mxu0 %v2338
      %v2627 = vpop.f32.mrf.mxu0
      %v2628 = vadd.f32 %v1787, %v2627
      %v2629 = vpop.f32.mrf.mxu0
      %v2630 = vadd.f32 %v1792, %v2629
      %2631 = vmatmul.bf16.gmra.mxu0 %v2339
      %v2632 = vpop.f32.mrf.mxu0
      %v2633 = vadd.f32 %v1797, %v2632
      %v2634 = vpop.f32.mrf.mxu0
      %v2635 = vadd.f32 %v1802, %v2634
      %2636 = vmatmul.bf16.gmra.mxu0 %v2340
      %v2637 = vpop.f32.mrf.mxu0
      %v2638 = vadd.f32 %v1807, %v2637
      %v2639 = vpop.f32.mrf.mxu0
      %v2640 = vadd.f32 %v1812, %v2639
      %2641 = vmatmul.bf16.gmra.mxu0 %v2341
      %v2642 = vpop.f32.mrf.mxu0
      %v2643 = vadd.f32 %v1817, %v2642
      %v2644 = vpop.f32.mrf.mxu0
      %v2645 = vadd.f32 %v1822, %v2644
      %2646 = vmatmul.bf16.gmra.mxu0 %v2342
      %v2647 = vpop.f32.mrf.mxu0
      %v2648 = vadd.f32 %v1827, %v2647
      %v2649 = vpop.f32.mrf.mxu0
      %v2650 = vadd.f32 %v1832, %v2649
      %2651 = vmatmul.bf16.gmra.mxu0 %v2343
      %v2652 = vpop.f32.mrf.mxu0
      %v2653 = vadd.f32 %v1837, %v2652
      %v2654 = vpop.f32.mrf.mxu0
      %v2655 = vadd.f32 %v1842, %v2654
      %2656 = vmatmul.bf16.gmra.mxu0 %v2344
      %v2657 = vpop.f32.mrf.mxu0
      %v2658 = vadd.f32 %v1847, %v2657
      %v2659 = vpop.f32.mrf.mxu0
      %v2660 = vadd.f32 %v1852, %v2659
      %2661 = vmatmul.bf16.gmra.mxu0 %v2345
      %v2662 = vpop.f32.mrf.mxu0
      %v2663 = vadd.f32 %v1857, %v2662
      %v2664 = vpop.f32.mrf.mxu0
      %v2665 = vadd.f32 %v1862, %v2664
      %2666 = vmatmul.bf16.gmra.mxu0 %v2346
      %v2667 = vpop.f32.mrf.mxu0
      %v2668 = vadd.f32 %v1867, %v2667
      %v2669 = vpop.f32.mrf.mxu0
      %v2670 = vadd.f32 %v1872, %v2669
      %2671 = vmatmul.bf16.gmra.mxu0 %v2347
      %v2672 = vpop.f32.mrf.mxu0
      %v2673 = vadd.f32 %v1877, %v2672
      %v2674 = vpop.f32.mrf.mxu0
      %v2675 = vadd.f32 %v1882, %v2674
      %2676 = vmatmul.bf16.gmra.mxu0 %v2348
      %v2677 = vpop.f32.mrf.mxu0
      %v2678 = vadd.f32 %v1887, %v2677
      %v2679 = vpop.f32.mrf.mxu0
      %v2680 = vadd.f32 %v1892, %v2679
      %2681 = vmatmul.bf16.gmra.mxu0 %v2349
      %v2682 = vpop.f32.mrf.mxu0
      %v2683 = vadd.f32 %v1897, %v2682
      %v2684 = vpop.f32.mrf.mxu0
      %v2685 = vadd.f32 %v1902, %v2684
      %2686 = vmatmul.bf16.gmra.mxu0 %v2350
      %v2687 = vpop.f32.mrf.mxu0
      %v2688 = vadd.f32 %v1907, %v2687
      %v2689 = vpop.f32.mrf.mxu0
      %v2690 = vadd.f32 %v1912, %v2689
      %2691 = vmatmul.bf16.gmra.mxu0 %v2351
      %v2692 = vpop.f32.mrf.mxu0
      %v2693 = vadd.f32 %v1917, %v2692
      %v2694 = vpop.f32.mrf.mxu0
      %v2695 = vadd.f32 %v1922, %v2694
      %2696 = vmatmul.bf16.gmra.mxu0 %v2352
      %v2697 = vpop.f32.mrf.mxu0
      %v2698 = vadd.f32 %v1927, %v2697
      %v2699 = vpop.f32.mrf.mxu0
      %v2700 = vadd.f32 %v1932, %v2699
      %2701 = vmatmul.bf16.gmra.mxu0 %v2353
      %v2702 = vpop.f32.mrf.mxu0
      %v2703 = vadd.f32 %v1937, %v2702
      %v2704 = vpop.f32.mrf.mxu0
      %v2705 = vadd.f32 %v1942, %v2704
      %2706 = vmatmul.bf16.gmra.mxu0 %v2354
      %v2707 = vpop.f32.mrf.mxu0
      %v2708 = vadd.f32 %v1947, %v2707
      %v2709 = vpop.f32.mrf.mxu0
      %v2710 = vadd.f32 %v1952, %v2709
      %2711 = vmatmul.bf16.gmra.mxu0 %v2355
      %v2712 = vpop.f32.mrf.mxu0
      %v2713 = vadd.f32 %v1957, %v2712
      %v2714 = vpop.f32.mrf.mxu0
      %v2715 = vadd.f32 %v1962, %v2714
      %2716 = vmatmul.bf16.gmra.mxu0 %v2356
      %v2717 = vpop.f32.mrf.mxu0
      %v2718 = vadd.f32 %v1967, %v2717
      %v2719 = vpop.f32.mrf.mxu0
      %v2720 = vadd.f32 %v1972, %v2719
      %2721 = vmatmul.bf16.gmra.mxu0 %v2357
      %v2722 = vpop.f32.mrf.mxu0
      %v2723 = vadd.f32 %v1977, %v2722
      %v2724 = vpop.f32.mrf.mxu0
      %v2725 = vadd.f32 %v1982, %v2724
      %2726 = vmatmul.bf16.gmra.mxu0 %v2358
      %v2727 = vpop.f32.mrf.mxu0
      %v2728 = vadd.f32 %v1987, %v2727
      %v2729 = vpop.f32.mrf.mxu0
      %v2730 = vadd.f32 %v1992, %v2729
      %2731 = vmatmul.bf16.gmra.mxu0 %v2359
      %v2732 = vpop.f32.mrf.mxu0
      %v2733 = vadd.f32 %v1997, %v2732
      %v2734 = vpop.f32.mrf.mxu0
      %v2735 = vadd.f32 %v2002, %v2734
      %2736 = vmatmul.bf16.gmra.mxu0 %v2360
      %v2737 = vpop.f32.mrf.mxu0
      %v2738 = vadd.f32 %v2007, %v2737
      %v2739 = vpop.f32.mrf.mxu0
      %v2740 = vadd.f32 %v2012, %v2739
      %2741 = vmatmul.bf16.gmra.mxu0 %v2361
      %v2742 = vpop.f32.mrf.mxu0
      %v2743 = vadd.f32 %v2017, %v2742
      %v2744 = vpop.f32.mrf.mxu0
      %v2745 = vadd.f32 %v2022, %v2744
      %2746 = vmatmul.bf16.gmra.mxu0 %v2362
      %v2747 = vpop.f32.mrf.mxu0
      %v2748 = vadd.f32 %v2027, %v2747
      %v2749 = vpop.f32.mrf.mxu0
      %v2750 = vadd.f32 %v2032, %v2749
      %2751 = vmatmul.bf16.gmra.mxu0 %v2363
      %v2752 = vpop.f32.mrf.mxu0
      %v2753 = vadd.f32 %v2037, %v2752
      %v2754 = vpop.f32.mrf.mxu0
      %v2755 = vadd.f32 %v2042, %v2754
      %2756 = vdwg.mxu0
      %v2757 = vmax.f32 %v2438, 0.0
      %v2758 = vmax.f32 %v2440, 0.0
      %v2759 = vmax.f32 %v2443, 0.0
      %v2760 = vmax.f32 %v2445, 0.0
      %v2761 = vmax.f32 %v2448, 0.0
      %v2762 = vmax.f32 %v2450, 0.0
      %v2763 = vmax.f32 %v2453, 0.0
      %v2764 = vmax.f32 %v2455, 0.0
      %v2765 = vmax.f32 %v2458, 0.0
      %v2766 = vmax.f32 %v2460, 0.0
      %v2767 = vmax.f32 %v2463, 0.0
      %v2768 = vmax.f32 %v2465, 0.0
      %v2769 = vmax.f32 %v2468, 0.0
      %v2770 = vmax.f32 %v2470, 0.0
      %v2771 = vmax.f32 %v2473, 0.0
      %v2772 = vmax.f32 %v2475, 0.0
      %v2773 = vmax.f32 %v2478, 0.0
      %v2774 = vmax.f32 %v2480, 0.0
      %v2775 = vmax.f32 %v2483, 0.0
      %v2776 = vmax.f32 %v2485, 0.0
      %v2777 = vmax.f32 %v2488, 0.0
      %v2778 = vmax.f32 %v2490, 0.0
      %v2779 = vmax.f32 %v2493, 0.0
      %v2780 = vmax.f32 %v2495, 0.0
      %v2781 = vmax.f32 %v2498, 0.0
      %v2782 = vmax.f32 %v2500, 0.0
      %v2783 = vmax.f32 %v2503, 0.0
      %v2784 = vmax.f32 %v2505, 0.0
      %v2785 = vmax.f32 %v2508, 0.0
      %v2786 = vmax.f32 %v2510, 0.0
      %v2787 = vmax.f32 %v2513, 0.0
      %v2788 = vmax.f32 %v2515, 0.0
      %v2789 = vmax.f32 %v2518, 0.0
      %v2790 = vmax.f32 %v2520, 0.0
      %v2791 = vmax.f32 %v2523, 0.0
      %v2792 = vmax.f32 %v2525, 0.0
      %v2793 = vmax.f32 %v2528, 0.0
      %v2794 = vmax.f32 %v2530, 0.0
      %v2795 = vmax.f32 %v2533, 0.0
      %v2796 = vmax.f32 %v2535, 0.0
      %v2797 = vmax.f32 %v2538, 0.0
      %v2798 = vmax.f32 %v2540, 0.0
      %v2799 = vmax.f32 %v2543, 0.0
      %v2800 = vmax.f32 %v2545, 0.0
      %v2801 = vmax.f32 %v2548, 0.0
      %v2802 = vmax.f32 %v2550, 0.0
      %v2803 = vmax.f32 %v2553, 0.0
      %v2804 = vmax.f32 %v2555, 0.0
      %v2805 = vmax.f32 %v2558, 0.0
      %v2806 = vmax.f32 %v2560, 0.0
      %v2807 = vmax.f32 %v2563, 0.0
      %v2808 = vmax.f32 %v2565, 0.0
      %v2809 = vmax.f32 %v2568, 0.0
      %v2810 = vmax.f32 %v2570, 0.0
      %v2811 = vmax.f32 %v2573, 0.0
      %v2812 = vmax.f32 %v2575, 0.0
      %v2813 = vmax.f32 %v2578, 0.0
      %v2814 = vmax.f32 %v2580, 0.0
      %v2815 = vmax.f32 %v2583, 0.0
      %v2816 = vmax.f32 %v2585, 0.0
      %v2817 = vmax.f32 %v2588, 0.0
      %v2818 = vmax.f32 %v2590, 0.0
      %v2819 = vmax.f32 %v2593, 0.0
      %v2820 = vmax.f32 %v2595, 0.0
      %v2821 = vmax.f32 %v2598, 0.0
      %v2822 = vmax.f32 %v2600, 0.0
      %v2823 = vmax.f32 %v2603, 0.0
      %v2824 = vmax.f32 %v2605, 0.0
      %v2825 = vmax.f32 %v2608, 0.0
      %v2826 = vmax.f32 %v2610, 0.0
      %v2827 = vmax.f32 %v2613, 0.0
      %v2828 = vmax.f32 %v2615, 0.0
      %v2829 = vmax.f32 %v2618, 0.0
      %v2830 = vmax.f32 %v2620, 0.0
      %v2831 = vmax.f32 %v2623, 0.0
      %v2832 = vmax.f32 %v2625, 0.0
      %v2833 = vmax.f32 %v2628, 0.0
      %v2834 = vmax.f32 %v2630, 0.0
      %v2835 = vmax.f32 %v2633, 0.0
      %v2836 = vmax.f32 %v2635, 0.0
      %v2837 = vmax.f32 %v2638, 0.0
      %v2838 = vmax.f32 %v2640, 0.0
      %v2839 = vmax.f32 %v2643, 0.0
      %v2840 = vmax.f32 %v2645, 0.0
      %v2841 = vmax.f32 %v2648, 0.0
      %v2842 = vmax.f32 %v2650, 0.0
      %v2843 = vmax.f32 %v2653, 0.0
      %v2844 = vmax.f32 %v2655, 0.0
      %v2845 = vmax.f32 %v2658, 0.0
      %v2846 = vmax.f32 %v2660, 0.0
      %v2847 = vmax.f32 %v2663, 0.0
      %v2848 = vmax.f32 %v2665, 0.0
      %v2849 = vmax.f32 %v2668, 0.0
      %v2850 = vmax.f32 %v2670, 0.0
      %v2851 = vmax.f32 %v2673, 0.0
      %v2852 = vmax.f32 %v2675, 0.0
      %v2853 = vmax.f32 %v2678, 0.0
      %v2854 = vmax.f32 %v2680, 0.0
      %v2855 = vmax.f32 %v2683, 0.0
      %v2856 = vmax.f32 %v2685, 0.0
      %v2857 = vmax.f32 %v2688, 0.0
      %v2858 = vmax.f32 %v2690, 0.0
      %v2859 = vmax.f32 %v2693, 0.0
      %v2860 = vmax.f32 %v2695, 0.0
      %v2861 = vmax.f32 %v2698, 0.0
      %v2862 = vmax.f32 %v2700, 0.0
      %v2863 = vmax.f32 %v2703, 0.0
      %v2864 = vmax.f32 %v2705, 0.0
      %v2865 = vmax.f32 %v2708, 0.0
      %v2866 = vmax.f32 %v2710, 0.0
      %v2867 = vmax.f32 %v2713, 0.0
      %v2868 = vmax.f32 %v2715, 0.0
      %v2869 = vmax.f32 %v2718, 0.0
      %v2870 = vmax.f32 %v2720, 0.0
      %v2871 = vmax.f32 %v2723, 0.0
      %v2872 = vmax.f32 %v2725, 0.0
      %v2873 = vmax.f32 %v2728, 0.0
      %v2874 = vmax.f32 %v2730, 0.0
      %v2875 = vmax.f32 %v2733, 0.0
      %v2876 = vmax.f32 %v2735, 0.0
      %v2877 = vmax.f32 %v2738, 0.0
      %v2878 = vmax.f32 %v2740, 0.0
      %v2879 = vmax.f32 %v2743, 0.0
      %v2880 = vmax.f32 %v2745, 0.0
      %v2881 = vmax.f32 %v2748, 0.0
      %v2882 = vmax.f32 %v2750, 0.0
      %v2883 = vmax.f32 %v2753, 0.0
      %v2884 = vmax.f32 %v2755, 0.0
      %2885 = vst [vmem:[%s414] sm:$0xff] %v2757
      %2886 = vst [vmem:[%s414 + $0x8] sm:$0xff] %v2758
      %2887 = vst [vmem:[%s414 + $0x10] sm:$0xff] %v2759
      %2888 = vst [vmem:[%s414 + $0x18] sm:$0xff] %v2760
      %2889 = vst [vmem:[%s414 + $0x20] sm:$0xff] %v2761
      %2890 = vst [vmem:[%s414 + $0x28] sm:$0xff] %v2762
      %2891 = vst [vmem:[%s414 + $0x30] sm:$0xff] %v2763
      %2892 = vst [vmem:[%s414 + $0x38] sm:$0xff] %v2764
      %2893 = vst [vmem:[%s414 + $0x40] sm:$0xff] %v2765
      %2894 = vst [vmem:[%s414 + $0x48] sm:$0xff] %v2766
      %2895 = vst [vmem:[%s414 + $0x50] sm:$0xff] %v2767
      %2896 = vst [vmem:[%s414 + $0x58] sm:$0xff] %v2768
      %2897 = vst [vmem:[%s414 + $0x60] sm:$0xff] %v2769
      %2898 = vst [vmem:[%s414 + $0x68] sm:$0xff] %v2770
      %2899 = vst [vmem:[%s414 + $0x70] sm:$0xff] %v2771
      %2900 = vst [vmem:[%s414 + $0x78] sm:$0xff] %v2772
      %2901 = vst [vmem:[%s414 + $0x80] sm:$0xff] %v2773
      %2902 = vst [vmem:[%s414 + $0x88] sm:$0xff] %v2774
      %2903 = vst [vmem:[%s414 + $0x90] sm:$0xff] %v2775
      %2904 = vst [vmem:[%s414 + $0x98] sm:$0xff] %v2776
      %2905 = vst [vmem:[%s414 + $0xa0] sm:$0xff] %v2777
      %2906 = vst [vmem:[%s414 + $0xa8] sm:$0xff] %v2778
      %2907 = vst [vmem:[%s414 + $0xb0] sm:$0xff] %v2779
      %2908 = vst [vmem:[%s414 + $0xb8] sm:$0xff] %v2780
      %2909 = vst [vmem:[%s414 + $0xc0] sm:$0xff] %v2781
      %2910 = vst [vmem:[%s414 + $0xc8] sm:$0xff] %v2782
      %2911 = vst [vmem:[%s414 + $0xd0] sm:$0xff] %v2783
      %2912 = vst [vmem:[%s414 + $0xd8] sm:$0xff] %v2784
      %2913 = vst [vmem:[%s414 + $0xe0] sm:$0xff] %v2785
      %2914 = vst [vmem:[%s414 + $0xe8] sm:$0xff] %v2786
      %2915 = vst [vmem:[%s414 + $0xf0] sm:$0xff] %v2787
      %2916 = vst [vmem:[%s414 + $0xf8] sm:$0xff] %v2788
      %2917 = vst [vmem:[%s414 + $0x100] sm:$0xff] %v2789
      %2918 = vst [vmem:[%s414 + $0x108] sm:$0xff] %v2790
      %2919 = vst [vmem:[%s414 + $0x110] sm:$0xff] %v2791
      %2920 = vst [vmem:[%s414 + $0x118] sm:$0xff] %v2792
      %2921 = vst [vmem:[%s414 + $0x120] sm:$0xff] %v2793
      %2922 = vst [vmem:[%s414 + $0x128] sm:$0xff] %v2794
      %2923 = vst [vmem:[%s414 + $0x130] sm:$0xff] %v2795
      %2924 = vst [vmem:[%s414 + $0x138] sm:$0xff] %v2796
      %2925 = vst [vmem:[%s414 + $0x140] sm:$0xff] %v2797
      %2926 = vst [vmem:[%s414 + $0x148] sm:$0xff] %v2798
      %2927 = vst [vmem:[%s414 + $0x150] sm:$0xff] %v2799
      %2928 = vst [vmem:[%s414 + $0x158] sm:$0xff] %v2800
      %2929 = vst [vmem:[%s414 + $0x160] sm:$0xff] %v2801
      %2930 = vst [vmem:[%s414 + $0x168] sm:$0xff] %v2802
      %2931 = vst [vmem:[%s414 + $0x170] sm:$0xff] %v2803
      %2932 = vst [vmem:[%s414 + $0x178] sm:$0xff] %v2804
      %2933 = vst [vmem:[%s414 + $0x180] sm:$0xff] %v2805
      %2934 = vst [vmem:[%s414 + $0x188] sm:$0xff] %v2806
      %2935 = vst [vmem:[%s414 + $0x190] sm:$0xff] %v2807
      %2936 = vst [vmem:[%s414 + $0x198] sm:$0xff] %v2808
      %2937 = vst [vmem:[%s414 + $0x1a0] sm:$0xff] %v2809
      %2938 = vst [vmem:[%s414 + $0x1a8] sm:$0xff] %v2810
      %2939 = vst [vmem:[%s414 + $0x1b0] sm:$0xff] %v2811
      %2940 = vst [vmem:[%s414 + $0x1b8] sm:$0xff] %v2812
      %2941 = vst [vmem:[%s414 + $0x1c0] sm:$0xff] %v2813
      %2942 = vst [vmem:[%s414 + $0x1c8] sm:$0xff] %v2814
      %2943 = vst [vmem:[%s414 + $0x1d0] sm:$0xff] %v2815
      %2944 = vst [vmem:[%s414 + $0x1d8] sm:$0xff] %v2816
      %2945 = vst [vmem:[%s414 + $0x1e0] sm:$0xff] %v2817
      %2946 = vst [vmem:[%s414 + $0x1e8] sm:$0xff] %v2818
      %2947 = vst [vmem:[%s414 + $0x1f0] sm:$0xff] %v2819
      %2948 = vst [vmem:[%s414 + $0x1f8] sm:$0xff] %v2820
      %2949 = vst [vmem:[%s414 + $0x200] sm:$0xff] %v2821
      %2950 = vst [vmem:[%s414 + $0x208] sm:$0xff] %v2822
      %2951 = vst [vmem:[%s414 + $0x210] sm:$0xff] %v2823
      %2952 = vst [vmem:[%s414 + $0x218] sm:$0xff] %v2824
      %2953 = vst [vmem:[%s414 + $0x220] sm:$0xff] %v2825
      %2954 = vst [vmem:[%s414 + $0x228] sm:$0xff] %v2826
      %2955 = vst [vmem:[%s414 + $0x230] sm:$0xff] %v2827
      %2956 = vst [vmem:[%s414 + $0x238] sm:$0xff] %v2828
      %2957 = vst [vmem:[%s414 + $0x240] sm:$0xff] %v2829
      %2958 = vst [vmem:[%s414 + $0x248] sm:$0xff] %v2830
      %2959 = vst [vmem:[%s414 + $0x250] sm:$0xff] %v2831
      %2960 = vst [vmem:[%s414 + $0x258] sm:$0xff] %v2832
      %2961 = vst [vmem:[%s414 + $0x260] sm:$0xff] %v2833
      %2962 = vst [vmem:[%s414 + $0x268] sm:$0xff] %v2834
      %2963 = vst [vmem:[%s414 + $0x270] sm:$0xff] %v2835
      %2964 = vst [vmem:[%s414 + $0x278] sm:$0xff] %v2836
      %2965 = vst [vmem:[%s414 + $0x280] sm:$0xff] %v2837
      %2966 = vst [vmem:[%s414 + $0x288] sm:$0xff] %v2838
      %2967 = vst [vmem:[%s414 + $0x290] sm:$0xff] %v2839
      %2968 = vst [vmem:[%s414 + $0x298] sm:$0xff] %v2840
      %2969 = vst [vmem:[%s414 + $0x2a0] sm:$0xff] %v2841
      %2970 = vst [vmem:[%s414 + $0x2a8] sm:$0xff] %v2842
      %2971 = vst [vmem:[%s414 + $0x2b0] sm:$0xff] %v2843
      %2972 = vst [vmem:[%s414 + $0x2b8] sm:$0xff] %v2844
      %2973 = vst [vmem:[%s414 + $0x2c0] sm:$0xff] %v2845
      %2974 = vst [vmem:[%s414 + $0x2c8] sm:$0xff] %v2846
      %2975 = vst [vmem:[%s414 + $0x2d0] sm:$0xff] %v2847
      %2976 = vst [vmem:[%s414 + $0x2d8] sm:$0xff] %v2848
      %2977 = vst [vmem:[%s414 + $0x2e0] sm:$0xff] %v2849
      %2978 = vst [vmem:[%s414 + $0x2e8] sm:$0xff] %v2850
      %2979 = vst [vmem:[%s414 + $0x2f0] sm:$0xff] %v2851
      %2980 = vst [vmem:[%s414 + $0x2f8] sm:$0xff] %v2852
      %2981 = vst [vmem:[%s414 + $0x300] sm:$0xff] %v2853
      %2982 = vst [vmem:[%s414 + $0x308] sm:$0xff] %v2854
      %2983 = vst [vmem:[%s414 + $0x310] sm:$0xff] %v2855
      %2984 = vst [vmem:[%s414 + $0x318] sm:$0xff] %v2856
      %2985 = vst [vmem:[%s414 + $0x320] sm:$0xff] %v2857
      %2986 = vst [vmem:[%s414 + $0x328] sm:$0xff] %v2858
      %2987 = vst [vmem:[%s414 + $0x330] sm:$0xff] %v2859
      %2988 = vst [vmem:[%s414 + $0x338] sm:$0xff] %v2860
      %2989 = vst [vmem:[%s414 + $0x340] sm:$0xff] %v2861
      %2990 = vst [vmem:[%s414 + $0x348] sm:$0xff] %v2862
      %2991 = vst [vmem:[%s414 + $0x350] sm:$0xff] %v2863
      %2992 = vst [vmem:[%s414 + $0x358] sm:$0xff] %v2864
      %2993 = vst [vmem:[%s414 + $0x360] sm:$0xff] %v2865
      %2994 = vst [vmem:[%s414 + $0x368] sm:$0xff] %v2866
      %2995 = vst [vmem:[%s414 + $0x370] sm:$0xff] %v2867
      %2996 = vst [vmem:[%s414 + $0x378] sm:$0xff] %v2868
      %2997 = vst [vmem:[%s414 + $0x380] sm:$0xff] %v2869
      %2998 = vst [vmem:[%s414 + $0x388] sm:$0xff] %v2870
      %2999 = vst [vmem:[%s414 + $0x390] sm:$0xff] %v2871
      %3000 = vst [vmem:[%s414 + $0x398] sm:$0xff] %v2872
      %3001 = vst [vmem:[%s414 + $0x3a0] sm:$0xff] %v2873
      %3002 = vst [vmem:[%s414 + $0x3a8] sm:$0xff] %v2874
      %3003 = vst [vmem:[%s414 + $0x3b0] sm:$0xff] %v2875
      %3004 = vst [vmem:[%s414 + $0x3b8] sm:$0xff] %v2876
      %3005 = vst [vmem:[%s414 + $0x3c0] sm:$0xff] %v2877
      %3006 = vst [vmem:[%s414 + $0x3c8] sm:$0xff] %v2878
      %3007 = vst [vmem:[%s414 + $0x3d0] sm:$0xff] %v2879
      %3008 = vst [vmem:[%s414 + $0x3d8] sm:$0xff] %v2880
      %3009 = vst [vmem:[%s414 + $0x3e0] sm:$0xff] %v2881
      %3010 = vst [vmem:[%s414 + $0x3e8] sm:$0xff] %v2882
      %3011 = vst [vmem:[%s414 + $0x3f0] sm:$0xff] %v2883
      %3012 = vst [vmem:[%s414 + $0x3f8] sm:$0xff] %v2884
      %p3013 = scmp.lt.s32.totalorder %s26, 1
      %s3014 = scalar_select %p3013, %s26, 1
      %p3015 = scmp.lt.s32.totalorder %s27, 0
      %s3016 = scalar_select %p3015, %s27, 0
      %s3017 = smul.addr %s3014, 128
      %s3018 = sadd.s32 %s3016, %s3017
      %s3019 = smul.addr %s3018, 8
      %s3020 = scalar_lea.vmem %s11, %s3019
      // Predicated region
      $region65: #{pointnet_forward.1} parent=63 // pred_check
        %p3021 = pneg %p292
      $region66: #{pointnet_forward.1} parent=63 // pred_check_branch
        %3023 = sbr.rel (%p3021) target = $region68
      $region67: #{pointnet_forward.1} parent=63 // pred_region
        _
      $region68: #{pointnet_forward.1} parent=63 // pred_fallthru
        _
    $region64: #{pointnet_forward.1} parent=5 // pred_fallthru
      _
    %p3024 = scmp.le.s32.totalorder 2, %s17
    // Predicated region
    $region69: #{pointnet_forward.1} parent=5 // pred_check
      %p3025 = pneg %p3024
    $region70: #{pointnet_forward.1} parent=5 // pred_check_branch
      %3027 = sbr.rel (%p3025) target = $region72
    $region71: #{pointnet_forward.1} parent=5 // pred_region
      %s3028 = ssub.s32 %s17, 2
      // Predicated region
      $region73: #{pointnet_forward.1} parent=71 // pred_check
        %p3029 = pneg %p298
      $region74: #{pointnet_forward.1} parent=71 // pred_check_branch
        %3031 = sbr.rel (%p3029) target = $region76
      $region75: #{pointnet_forward.1} parent=71 // pred_region
        %p3032 = scmp.lt.s32.totalorder %s28, 1
        %s3033 = scalar_select %p3032, %s28, 1
        %p3034 = scmp.lt.s32.totalorder %s29, 0
        %s3035 = scalar_select %p3034, %s29, 0
        %s3036 = smul.addr %s3033, 128
        %s3037 = sadd.s32 %s3035, %s3036
        %s3038 = smul.addr %s3037, 8
        %s3039 = scalar_lea.vmem %s11, %s3038
      $region76: #{pointnet_forward.1} parent=71 // pred_fallthru
        _
    $region72: #{pointnet_forward.1} parent=5 // pred_fallthru
      _
  $region6: #{pointnet_forward.1} parent=0 // loop_footer
    %s21 = sadd.s32 1, %s17
  $region7: #{pointnet_forward.1} parent=0 // loop_footer_branch
    %16 = sbr.rel target = $region3
  $region8: #{pointnet_forward.1} parent=0 // loop_exit
    _

</llo_original>
